<compile_context>
chip_gen: v5e
topology: v5e:2x2
jax: 0.10.0
libtpu: 0.0.40
codegen_flags: <defaults>
</compile_context>

<pallas_src>
import functools

import jax
import jax.numpy as jnp
import numpy as np
from jax.experimental import pallas as pl
from jax.experimental.pallas import tpu as pltpu

EPS = 1e-5
_VMEM_LIMIT = 32 * 1024 * 1024  # explicit scoped-VMEM budget; safe on v5e/v6e/v7x


def _cparams(semantics):
    return pltpu.CompilerParams(dimension_semantics=semantics,
                                vmem_limit_bytes=_VMEM_LIMIT)


# ------------------------------ small helpers ---------------------------------
def _bn_affine(s1, s2, count, gamma, beta):
    """Fold batch stats (sum, sumsq) + gamma/beta into per-channel scale/shift.

    TODO(synk): E[y^2]-E[y]^2 in f32 can cancel at very large M; fine at these scales.
    """
    mean = s1 / count
    var = jnp.maximum(s2 / count - mean * mean, 0.0)
    inv = jax.lax.rsqrt(var + EPS)
    a = gamma.reshape(-1, 1) * inv
    c = beta.reshape(-1, 1) - mean * a
    return a, c


def _im2col_nk(x_nchw, ksize, stride, padding):
    """Per-image folded im2col: (N, KH*KW*C, Ho*Wo).  N stays leading -> no transposes."""
    N, C, H, W = x_nchw.shape
    Ho = (H + 2 * padding - ksize) // stride + 1
    Wo = (W + 2 * padding - ksize) // stride + 1
    xp = jnp.pad(x_nchw, ((0, 0), (0, 0), (padding, padding), (padding, padding)))
    taps = []
    for kh in range(ksize):
        for kw in range(ksize):
            sl = xp[:, :, kh:kh + (Ho - 1) * stride + 1:stride,
                          kw:kw + (Wo - 1) * stride + 1:stride]
            taps.append(sl.reshape(N, C, Ho * Wo))
    return jnp.concatenate(taps, axis=1)


# ------------------------------- Pallas kernels --------------------------------
def _im2col_conv_stats_kernel(p_ref, w_ref, b_ref, y_ref, s1_ref, s2_ref,
                              s1_acc, s2_acc):
    """Folded (Cout,K)@(K,HW) bf16 MXU matmul per image + bias; BN sums in scratch."""
    n = pl.program_id(0)
    y = jnp.dot(w_ref[...], p_ref[...], preferred_element_type=jnp.float32)
    y = y + b_ref[...]
    y_ref[...] = y.astype(y_ref.dtype)

    @pl.when(n == 0)
    def _():
        s1_acc[...] = jnp.zeros_like(s1_acc)
        s2_acc[...] = jnp.zeros_like(s2_acc)

    s1_acc[...] += jnp.sum(y, axis=1, keepdims=True)
    s2_acc[...] += jnp.sum(y * y, axis=1, keepdims=True)

    @pl.when(n == pl.num_programs(0) - 1)
    def _():
        s1_ref[...] = s1_acc[...]
        s2_ref[...] = s2_acc[...]


def _make_tap_conv_stats_kernel(Ho, Wo, fuse_affine_relu):
    """3x3 / stride-1 / pad-1 conv with in-kernel taps (lane rolls + index masks),
    accumulated as 9 bf16 MXU dots in f32; per-channel BN sums kept in VMEM scratch.
    Optionally fuses the previous BatchNorm affine + ReLU on the input tile."""
    HW = Ho * Wo
    offsets = tuple((kh - 1, kw - 1) for kh in range(3) for kw in range(3))

    def conv_body(v, ho_ref, wo_ref, w_ref, b_ref, y_ref, s1_ref, s2_ref,
                  s1_acc, s2_acc):
        n = pl.program_id(0)
        ho = ho_ref[...]      # (1, HW) int32: row index of each output position
        wo = wo_ref[...]      # (1, HW) int32: col index of each output position
        acc = None
        for k, (dh, dw) in enumerate(offsets):
            shift = (-(dh * Wo + dw)) % HW
            t = v if shift == 0 else pltpu.roll(v, shift=shift, axis=1)
            valid = ((ho >= -dh) & (ho < Ho - dh) &
                     (wo >= -dw) & (wo < Wo - dw))
            t = jnp.where(valid, t, 0.0).astype(jnp.bfloat16)
            wk = w_ref[k].astype(jnp.bfloat16)
            d = jnp.dot(wk, t, preferred_element_type=jnp.float32)
            acc = d if acc is None else acc + d
        y = acc + b_ref[...]
        y_ref[...] = y.astype(y_ref.dtype)

        @pl.when(n == 0)
        def _():
            s1_acc[...] = jnp.zeros_like(s1_acc)
            s2_acc[...] = jnp.zeros_like(s2_acc)

        s1_acc[...] += jnp.sum(y, axis=1, keepdims=True)
        s2_acc[...] += jnp.sum(y * y, axis=1, keepdims=True)

        @pl.when(n == pl.num_programs(0) - 1)
        def _():
            s1_ref[...] = s1_acc[...]
            s2_ref[...] = s2_acc[...]

    if fuse_affine_relu:
        def kernel(x_ref, a_ref, c_ref, ho_ref, wo_ref, w_ref, b_ref,
                   y_ref, s1_ref, s2_ref, s1_acc, s2_acc):
            v = jnp.maximum(
                x_ref[...].astype(jnp.float32) * a_ref[...] + c_ref[...], 0.0)
            conv_body(v, ho_ref, wo_ref, w_ref, b_ref,
                      y_ref, s1_ref, s2_ref, s1_acc, s2_acc)
    else:
        def kernel(x_ref, ho_ref, wo_ref, w_ref, b_ref,
                   y_ref, s1_ref, s2_ref, s1_acc, s2_acc):
            conv_body(x_ref[...].astype(jnp.float32), ho_ref, wo_ref, w_ref, b_ref,
                      y_ref, s1_ref, s2_ref, s1_acc, s2_acc)
    return kernel


def _make_bn_skip_relu_kernel(use_conv_skip):
    """bn2-affine + (1x1-conv | identity) skip + add + ReLU, fully fused."""
    if use_conv_skip:
        def kernel(y_ref, a_ref, c_ref, xs_ref, w3_ref, b3_ref, o_ref):
            skip = jnp.dot(w3_ref[...], xs_ref[...],
                           preferred_element_type=jnp.float32) + b3_ref[...]
            o_ref[...] = jnp.maximum(
                y_ref[...].astype(jnp.float32) * a_ref[...] + c_ref[...] + skip,
                0.0).astype(o_ref.dtype)
    else:
        def kernel(y_ref, a_ref, c_ref, xs_ref, o_ref):
            o_ref[...] = jnp.maximum(
                y_ref[...].astype(jnp.float32) * a_ref[...] + c_ref[...]
                + xs_ref[...].astype(jnp.float32), 0.0).astype(o_ref.dtype)
    return kernel


# ----------------------------- pallas_call wrappers -----------------------------
def _im2col_conv_stats(patches, w_flat, b):
    """patches: (N, K, HW) bf16, w_flat: (Cout, K) bf16, b: (Cout,) f32."""
    N, K, HW = patches.shape
    Cout = w_flat.shape[0]
    return pl.pallas_call(
        _im2col_conv_stats_kernel,
        out_shape=(jax.ShapeDtypeStruct((N, Cout, HW), jnp.bfloat16),
                   jax.ShapeDtypeStruct((Cout, 1), jnp.float32),
                   jax.ShapeDtypeStruct((Cout, 1), jnp.float32)),
        grid=(N,),
        in_specs=[pl.BlockSpec((None, K, HW), lambda n: (n, 0, 0)),
                  pl.BlockSpec((Cout, K), lambda n: (0, 0)),
                  pl.BlockSpec((Cout, 1), lambda n: (0, 0))],
        out_specs=(pl.BlockSpec((None, Cout, HW), lambda n: (n, 0, 0)),
                   pl.BlockSpec((Cout, 1), lambda n: (0, 0)),
                   pl.BlockSpec((Cout, 1), lambda n: (0, 0))),
        scratch_shapes=[pltpu.VMEM((Cout, 1), jnp.float32),
                        pltpu.VMEM((Cout, 1), jnp.float32)],
        compiler_params=_cparams(("arbitrary",)),
    )(patches, w_flat, b.reshape(Cout, 1))


def _tap_conv_stats(x_ncm, w_taps, b, Ho, Wo, affine=None):
    """x_ncm: (N, Cin, HW); w_taps: (9, Cout, Cin) f32; b: (Cout,) f32."""
    N, Cin, HW = x_ncm.shape
    assert HW == Ho * Wo and HW % 128 == 0
    Cout = w_taps.shape[1]
    ho_idx = jnp.repeat(jnp.arange(Ho, dtype=jnp.int32), Wo).reshape(1, HW)
    wo_idx = jnp.tile(jnp.arange(Wo, dtype=jnp.int32), Ho).reshape(1, HW)
    fuse = affine is not None

    in_specs = [pl.BlockSpec((None, Cin, HW), lambda n: (n, 0, 0))]
    args = [x_ncm]
    if fuse:
        a, c = affine
        in_specs += [pl.BlockSpec((Cin, 1), lambda n: (0, 0)),
                     pl.BlockSpec((Cin, 1), lambda n: (0, 0))]
        args += [a, c]
    in_specs += [pl.BlockSpec((1, HW), lambda n: (0, 0)),
                 pl.BlockSpec((1, HW), lambda n: (0, 0)),
                 pl.BlockSpec((9, Cout, Cin), lambda n: (0, 0, 0)),
                 pl.BlockSpec((Cout, 1), lambda n: (0, 0))]
    args += [ho_idx, wo_idx, w_taps, b.reshape(Cout, 1)]

    return pl.pallas_call(
        _make_tap_conv_stats_kernel(Ho, Wo, fuse),
        out_shape=(jax.ShapeDtypeStruct((N, Cout, HW), jnp.bfloat16),
                   jax.ShapeDtypeStruct((Cout, 1), jnp.float32),
                   jax.ShapeDtypeStruct((Cout, 1), jnp.float32)),
        grid=(N,),
        in_specs=in_specs,
        out_specs=(pl.BlockSpec((None, Cout, HW), lambda n: (n, 0, 0)),
                   pl.BlockSpec((Cout, 1), lambda n: (0, 0)),
                   pl.BlockSpec((Cout, 1), lambda n: (0, 0))),
        scratch_shapes=[pltpu.VMEM((Cout, 1), jnp.float32),
                        pltpu.VMEM((Cout, 1), jnp.float32)],
        compiler_params=_cparams(("arbitrary",)),
    )(*args)


def _bn_skip_relu(y_pre, a, c, skip, w3=None, b3=None):
    N, Cout, HW = y_pre.shape
    Cs = skip.shape[1]
    use_conv = w3 is not None
    in_specs = [pl.BlockSpec((None, Cout, HW), lambda n: (n, 0, 0)),
                pl.BlockSpec((Cout, 1), lambda n: (0, 0)),
                pl.BlockSpec((Cout, 1), lambda n: (0, 0)),
                pl.BlockSpec((None, Cs, HW), lambda n: (n, 0, 0))]
    args = [y_pre, a, c, skip]
    if use_conv:
        in_specs += [pl.BlockSpec((Cout, Cs), lambda n: (0, 0)),
                     pl.BlockSpec((Cout, 1), lambda n: (0, 0))]
        args += [w3, b3.reshape(Cout, 1)]
    return pl.pallas_call(
        _make_bn_skip_relu_kernel(use_conv),
        out_shape=jax.ShapeDtypeStruct((N, Cout, HW), jnp.float32),
        grid=(N,),
        in_specs=in_specs,
        out_specs=pl.BlockSpec((None, Cout, HW), lambda n: (n, 0, 0)),
        compiler_params=_cparams(("parallel",)),
    )(*args)


# --------------------------------- forward -------------------------------------
def residual_forward(x_nchw, params, *, use_1x1conv, stride):
    x = x_nchw.astype(jnp.float32)
    N, Cin, H, W = x.shape
    Cout = params["w1"].shape[0]
    Ho = (H + 2 - 3) // stride + 1
    Wo = (W + 2 - 3) // stride + 1
    HWo = Ho * Wo
    M1 = N * HWo
    roll_ok = (HWo % 128 == 0)   # lane-aligned in-kernel rolls

    # ---- stage 1: conv1 + bias (pre-BN, bf16 out) + batch stats -----------------
    if stride == 1 and roll_ok:
        w1_taps = jnp.transpose(params["w1"], (2, 3, 0, 1)).reshape(9, Cout, Cin)
        y1_pre, s1, q1 = _tap_conv_stats(x.reshape(N, Cin, H * W), w1_taps,
                                         params["b1"], Ho, Wo)
    else:
        # TODO(synk): the strided taps could be gathered in-kernel (pl.ds stride=2);
        # the wrapper-side folded im2col (bf16, ~2.25x of the pre-downsample input)
        # is kept for the stride-2 path.
        w1_flat = jnp.transpose(params["w1"], (0, 2, 3, 1)
                                ).reshape(Cout, 9 * Cin).astype(jnp.bfloat16)
        p1 = _im2col_nk(x.astype(jnp.bfloat16), 3, stride, 1)
        y1_pre, s1, q1 = _im2col_conv_stats(p1, w1_flat, params["b1"])
    a1, c1 = _bn_affine(s1, q1, M1, params["gamma1"], params["beta1"])

    # ---- stage 2: fused bn1-affine + ReLU + conv2 (in-kernel taps) + stats -------
    if roll_ok:
        w2_taps = jnp.transpose(params["w2"], (2, 3, 0, 1)).reshape(9, Cout, Cout)
        y2_pre, s2, q2 = _tap_conv_stats(y1_pre, w2_taps, params["b2"], Ho, Wo,
                                         affine=(a1, c1))
    else:
        # Fallback for non-lane-aligned HW: bn1+ReLU in XLA, conv2 via folded patches.
        y1_act = jnp.maximum(y1_pre.astype(jnp.float32) * a1[None] + c1[None], 0.0)
        w2_flat = jnp.transpose(params["w2"], (0, 2, 3, 1)
                                ).reshape(Cout, 9 * Cout).astype(jnp.bfloat16)
        p2 = _im2col_nk(y1_act.reshape(N, Cout, Ho, Wo).astype(jnp.bfloat16), 3, 1, 1)
        y2_pre, s2, q2 = _im2col_conv_stats(p2, w2_flat, params["b2"])
    a2, c2 = _bn_affine(s2, q2, M1, params["gamma2"], params["beta2"])

    # ---- stage 3: fused bn2-affine + skip (1x1 conv | identity) + add + ReLU -----
    if use_1x1conv:
        x_sub = x[:, :, ::stride, ::stride].reshape(N, Cin, HWo).astype(jnp.bfloat16)
        w3 = params["w3"].reshape(Cout, Cin).astype(jnp.bfloat16)
        out = _bn_skip_relu(y2_pre, a2, c2, x_sub, w3, params["b3"])
    else:
        assert stride == 1 and Cin == Cout
        out = _bn_skip_relu(y2_pre, a2, c2, x.reshape(N, Cout, H * W))

    return out.reshape(N, Cout, Ho, Wo)   # NCHW, free reshape


# ----------------------------- pure-JAX reference --------------------------------
def reference_forward(x_nchw, params, *, use_1x1conv, stride):
    x = jnp.transpose(x_nchw, (0, 2, 3, 1)).astype(jnp.float32)

    def conv(v, w, b, s, p):
        w_hwio = jnp.transpose(w, (2, 3, 1, 0))
        y = jax.lax.conv_general_dilated(
            v, w_hwio, (s, s), [(p, p), (p, p)],
            dimension_numbers=("NHWC", "HWIO", "NHWC"))
        return y + b

    def bn(y, gamma, beta):
        mean = jnp.mean(y, axis=(0, 1, 2), keepdims=True)
        var = jnp.mean(jnp.square(y - mean), axis=(0, 1, 2), keepdims=True)
        return (y - mean) * jax.lax.rsqrt(var + EPS) * gamma + beta

    y = jax.nn.relu(bn(conv(x, params["w1"], params["b1"], stride, 1),
                       params["gamma1"], params["beta1"]))
    y = bn(conv(y, params["w2"], params["b2"], 1, 1),
           params["gamma2"], params["beta2"])
    xs = conv(x, params["w3"], params["b3"], stride, 0) if use_1x1conv else x
    return jnp.transpose(jax.nn.relu(y + xs), (0, 3, 1, 2))


# ----------------------------------- main ----------------------------------------
if __name__ == "__main__":
    key = jax.random.PRNGKey(0)

    def make_params(k, cin, cout, with_1x1):
        ks = jax.random.split(k, 10)
        p = {
            "w1": 0.1 * jax.random.normal(ks[0], (cout, cin, 3, 3), jnp.float32),
            "b1": 0.1 * jax.random.normal(ks[1], (cout,), jnp.float32),
            "w2": 0.1 * jax.random.normal(ks[2], (cout, cout, 3, 3), jnp.float32),
            "b2": 0.1 * jax.random.normal(ks[3], (cout,), jnp.float32),
            "gamma1": 1.0 + 0.1 * jax.random.normal(ks[4], (cout,), jnp.float32),
            "beta1": 0.1 * jax.random.normal(ks[5], (cout,), jnp.float32),
            "gamma2": 1.0 + 0.1 * jax.random.normal(ks[6], (cout,), jnp.float32),
            "beta2": 0.1 * jax.random.normal(ks[7], (cout,), jnp.float32),
        }
        if with_1x1:
            p["w3"] = 0.1 * jax.random.normal(ks[8], (cout, cin, 1, 1), jnp.float32)
            p["b3"] = 0.1 * jax.random.normal(ks[9], (cout,), jnp.float32)
        return p

    k1, k2, k3, k4 = jax.random.split(key, 4)
    TOL = dict(rtol=3e-2, atol=3e-2)   # bf16 MXU operands vs f32 reference

    # Config A: Residual(4, 8, use_1x1conv=True, stride=2) on (2, 4, 32, 32)
    params_a = make_params(k1, 4, 8, True)
    x_a = jax.random.uniform(k2, (2, 4, 32, 32), jnp.float32)
    fwd_a = jax.jit(functools.partial(residual_forward, use_1x1conv=True, stride=2))
    out_a = jax.block_until_ready(fwd_a(x_a, params_a))
    ref_a = reference_forward(x_a, params_a, use_1x1conv=True, stride=2)
    np.testing.assert_allclose(np.asarray(out_a), np.asarray(ref_a), **TOL)

    # Config B: Residual(8, 8) — identity skip, stride 1, on (2, 8, 16, 16)
    params_b = make_params(k3, 8, 8, False)
    x_b = jax.random.uniform(k4, (2, 8, 16, 16), jnp.float32)
    fwd_b = jax.jit(functools.partial(residual_forward, use_1x1conv=False, stride=1))
    out_b = jax.block_until_ready(fwd_b(x_b, params_b))
    ref_b = reference_forward(x_b, params_b, use_1x1conv=False, stride=1)
    np.testing.assert_allclose(np.asarray(out_b), np.asarray(ref_b), **TOL)

    print("KERNEL_OK")
</pallas_src>

<mosaic_0001>
module attributes {stable_mosaic.version = 11 : i64} {
  func.func @_im2col_conv_stats_kernel(%arg0: i32, %arg1: memref<1x36x256xbf16, #tpu.memory_space<vmem>>, %arg2: memref<8x36xbf16, #tpu.memory_space<vmem>>, %arg3: memref<8x1xf32, #tpu.memory_space<vmem>>, %arg4: memref<1x8x256xbf16, #tpu.memory_space<vmem>>, %arg5: memref<8x1xf32, #tpu.memory_space<vmem>>, %arg6: memref<8x1xf32, #tpu.memory_space<vmem>>, %arg7: memref<8x1xf32, #tpu.memory_space<vmem>>, %arg8: memref<8x1xf32, #tpu.memory_space<vmem>>) attributes {dimension_semantics = [#tpu.dimension_semantics<arbitrary>], iteration_bounds = array<i64: 2>, scalar_prefetch = 0 : i64, scratch_operands = 2 : i64, tpu.core_type = #tpu.core_type<tc>, window_params = [{transform_indices = @transform_0, window_bounds = array<i64: 1, 36, 256>}, {pipeline_mode = #tpu.pipeline_mode<synchronous>, transform_indices = @transform_1, window_bounds = array<i64: 8, 36>}, {pipeline_mode = #tpu.pipeline_mode<synchronous>, transform_indices = @transform_2, window_bounds = array<i64: 8, 1>}, {transform_indices = @transform_3, window_bounds = array<i64: 1, 8, 256>}, {pipeline_mode = #tpu.pipeline_mode<synchronous>, transform_indices = @transform_4, window_bounds = array<i64: 8, 1>}, {pipeline_mode = #tpu.pipeline_mode<synchronous>, transform_indices = @transform_5, window_bounds = array<i64: 8, 1>}]} {
    %c0 = arith.constant 0 : index
    %c0_0 = arith.constant 0 : index
    %0 = vector.load %arg2[%c0, %c0_0] : memref<8x36xbf16, #tpu.memory_space<vmem>>, vector<8x36xbf16>
    %c0_1 = arith.constant 0 : index
    %c0_2 = arith.constant 0 : index
    %c0_3 = arith.constant 0 : index
    %1 = vector.load %arg1[%c0_1, %c0_2, %c0_3] : memref<1x36x256xbf16, #tpu.memory_space<vmem>>, vector<1x36x256xbf16>
    %2 = vector.shape_cast %1 : vector<1x36x256xbf16> to vector<36x256xbf16>
    %cst = arith.constant dense<0.000000e+00> : vector<8x256xf32>
    %3 = tpu.matmul %0, %2, %cst {dimension_numbers = #tpu.dot_dimension_numbers<[1], [0], [0], [1], [0, 0, 1, 1], [], []>} : vector<8x36xbf16>, vector<36x256xbf16>, vector<8x256xf32> -> vector<8x256xf32>
    %c0_4 = arith.constant 0 : index
    %c0_5 = arith.constant 0 : index
    %4 = vector.load %arg3[%c0_4, %c0_5] : memref<8x1xf32, #tpu.memory_space<vmem>>, vector<8x1xf32>
    %5 = vector.broadcast %4 : vector<8x1xf32> to vector<8x256xf32>
    %6 = arith.addf %3, %5 : vector<8x256xf32>
    %7 = arith.truncf %6 : vector<8x256xf32> to vector<8x256xbf16>
    %c0_6 = arith.constant 0 : index
    %c0_7 = arith.constant 0 : index
    %c0_8 = arith.constant 0 : index
    %8 = vector.load %arg4[%c0_6, %c0_7, %c0_8] : memref<1x8x256xbf16, #tpu.memory_space<vmem>>, vector<1x8x256xbf16>
    %9 = vector.shape_cast %8 : vector<1x8x256xbf16> to vector<8x256xbf16>
    %10 = vector.shape_cast %7 : vector<8x256xbf16> to vector<1x8x256xbf16>
    tpu.vector_store %arg4[%c0_6, %c0_7, %c0_8], %10 {strides = array<i32>} : memref<1x8x256xbf16, #tpu.memory_space<vmem>>, vector<1x8x256xbf16>,
    %c0_i32 = arith.constant 0 : i32
    %11 = arith.cmpi eq, %arg0, %c0_i32 : i32
    %12 = arith.extui %11 : i1 to i32
    %c0_i32_9 = arith.constant 0 : i32
    %13 = arith.cmpi ne, %12, %c0_i32_9 : i32
    scf.if %13 {
      %cst_21 = arith.constant 0.000000e+00 : f32
      %28 = vector.broadcast %cst_21 : f32 to vector<8x1xf32>
      %c0_22 = arith.constant 0 : index
      %c0_23 = arith.constant 0 : index
      %29 = vector.load %arg7[%c0_22, %c0_23] : memref<8x1xf32, #tpu.memory_space<vmem>>, vector<8x1xf32>
      tpu.vector_store %arg7[%c0_22, %c0_23], %28 {strides = array<i32>} : memref<8x1xf32, #tpu.memory_space<vmem>>, vector<8x1xf32>,
      %cst_24 = arith.constant 0.000000e+00 : f32
      %30 = vector.broadcast %cst_24 : f32 to vector<8x1xf32>
      %c0_25 = arith.constant 0 : index
      %c0_26 = arith.constant 0 : index
      %31 = vector.load %arg8[%c0_25, %c0_26] : memref<8x1xf32, #tpu.memory_space<vmem>>, vector<8x1xf32>
      tpu.vector_store %arg8[%c0_25, %c0_26], %30 {strides = array<i32>} : memref<8x1xf32, #tpu.memory_space<vmem>>, vector<8x1xf32>,
    } else {
    }
    %c0_10 = arith.constant 0 : index
    %c0_11 = arith.constant 0 : index
    %14 = vector.load %arg7[%c0_10, %c0_11] : memref<8x1xf32, #tpu.memory_space<vmem>>, vector<8x1xf32>
    %cst_12 = arith.constant dense<0.000000e+00> : vector<8xf32>
    %15 = vector.multi_reduction <add>, %6, %cst_12 [1] : vector<8x256xf32> to vector<8xf32>
    %16 = vector.shape_cast %15 : vector<8xf32> to vector<8x1xf32>
    %17 = arith.addf %14, %16 : vector<8x1xf32>
    %c0_13 = arith.constant 0 : index
    %c0_14 = arith.constant 0 : index
    %18 = vector.load %arg7[%c0_13, %c0_14] : memref<8x1xf32, #tpu.memory_space<vmem>>, vector<8x1xf32>
    tpu.vector_store %arg7[%c0_13, %c0_14], %17 {strides = array<i32>} : memref<8x1xf32, #tpu.memory_space<vmem>>, vector<8x1xf32>,
    %c0_15 = arith.constant 0 : index
    %c0_16 = arith.constant 0 : index
    %19 = vector.load %arg8[%c0_15, %c0_16] : memref<8x1xf32, #tpu.memory_space<vmem>>, vector<8x1xf32>
    %20 = arith.mulf %6, %6 : vector<8x256xf32>
    %cst_17 = arith.constant dense<0.000000e+00> : vector<8xf32>
    %21 = vector.multi_reduction <add>, %20, %cst_17 [1] : vector<8x256xf32> to vector<8xf32>
    %22 = vector.shape_cast %21 : vector<8xf32> to vector<8x1xf32>
    %23 = arith.addf %19, %22 : vector<8x1xf32>
    %c0_18 = arith.constant 0 : index
    %c0_19 = arith.constant 0 : index
    %24 = vector.load %arg8[%c0_18, %c0_19] : memref<8x1xf32, #tpu.memory_space<vmem>>, vector<8x1xf32>
    tpu.vector_store %arg8[%c0_18, %c0_19], %23 {strides = array<i32>} : memref<8x1xf32, #tpu.memory_space<vmem>>, vector<8x1xf32>,
    %c1_i32 = arith.constant 1 : i32
    %25 = arith.cmpi eq, %arg0, %c1_i32 : i32
    %26 = arith.extui %25 : i1 to i32
    %c0_i32_20 = arith.constant 0 : i32
    %27 = arith.cmpi ne, %26, %c0_i32_20 : i32
    scf.if %27 {
      %c0_21 = arith.constant 0 : index
      %c0_22 = arith.constant 0 : index
      %28 = vector.load %arg7[%c0_21, %c0_22] : memref<8x1xf32, #tpu.memory_space<vmem>>, vector<8x1xf32>
      %c0_23 = arith.constant 0 : index
      %c0_24 = arith.constant 0 : index
      %29 = vector.load %arg5[%c0_23, %c0_24] : memref<8x1xf32, #tpu.memory_space<vmem>>, vector<8x1xf32>
      tpu.vector_store %arg5[%c0_23, %c0_24], %28 {strides = array<i32>} : memref<8x1xf32, #tpu.memory_space<vmem>>, vector<8x1xf32>,
      %c0_25 = arith.constant 0 : index
      %c0_26 = arith.constant 0 : index
      %30 = vector.load %arg8[%c0_25, %c0_26] : memref<8x1xf32, #tpu.memory_space<vmem>>, vector<8x1xf32>
      %c0_27 = arith.constant 0 : index
      %c0_28 = arith.constant 0 : index
      %31 = vector.load %arg6[%c0_27, %c0_28] : memref<8x1xf32, #tpu.memory_space<vmem>>, vector<8x1xf32>
      tpu.vector_store %arg6[%c0_27, %c0_28], %30 {strides = array<i32>} : memref<8x1xf32, #tpu.memory_space<vmem>>, vector<8x1xf32>,
    } else {
    }
    return
  }
  func.func @transform_0(%arg0: i32) -> (i32, i32, i32) {
    %c0_i32 = arith.constant 0 : i32
    %c0_i32_0 = arith.constant 0 : i32
    %c0_i32_1 = arith.constant 0 : i32
    return %arg0, %c0_i32, %c0_i32_0 : i32, i32, i32
  }
  func.func @transform_1(%arg0: i32) -> (i32, i32) {
    %c0_i32 = arith.constant 0 : i32
    %c0_i32_0 = arith.constant 0 : i32
    %c0_i32_1 = arith.constant 0 : i32
    return %c0_i32, %c0_i32_0 : i32, i32
  }
  func.func @transform_2(%arg0: i32) -> (i32, i32) {
    %c0_i32 = arith.constant 0 : i32
    %c0_i32_0 = arith.constant 0 : i32
    %c0_i32_1 = arith.constant 0 : i32
    return %c0_i32, %c0_i32_0 : i32, i32
  }
  func.func @transform_3(%arg0: i32) -> (i32, i32, i32) {
    %c0_i32 = arith.constant 0 : i32
    %c0_i32_0 = arith.constant 0 : i32
    %c0_i32_1 = arith.constant 0 : i32
    return %arg0, %c0_i32, %c0_i32_0 : i32, i32, i32
  }
  func.func @transform_4(%arg0: i32) -> (i32, i32) {
    %c0_i32 = arith.constant 0 : i32
    %c0_i32_0 = arith.constant 0 : i32
    %c0_i32_1 = arith.constant 0 : i32
    return %c0_i32, %c0_i32_0 : i32, i32
  }
  func.func @transform_5(%arg0: i32) -> (i32, i32) {
    %c0_i32 = arith.constant 0 : i32
    %c0_i32_0 = arith.constant 0 : i32
    %c0_i32_1 = arith.constant 0 : i32
    return %c0_i32, %c0_i32_0 : i32, i32
  }
}

module attributes {stable_mosaic.version = 11 : i64} {
  func.func @kernel(%arg0: i32, %arg1: memref<1x8x256xbf16, #tpu.memory_space<vmem>>, %arg2: memref<8x1xf32, #tpu.memory_space<vmem>>, %arg3: memref<8x1xf32, #tpu.memory_space<vmem>>, %arg4: memref<1x256xi32, #tpu.memory_space<vmem>>, %arg5: memref<1x256xi32, #tpu.memory_space<vmem>>, %arg6: memref<9x8x8xf32, #tpu.memory_space<vmem>>, %arg7: memref<8x1xf32, #tpu.memory_space<vmem>>, %arg8: memref<1x8x256xbf16, #tpu.memory_space<vmem>>, %arg9: memref<8x1xf32, #tpu.memory_space<vmem>>, %arg10: memref<8x1xf32, #tpu.memory_space<vmem>>, %arg11: memref<8x1xf32, #tpu.memory_space<vmem>>, %arg12: memref<8x1xf32, #tpu.memory_space<vmem>>) attributes {dimension_semantics = [#tpu.dimension_semantics<arbitrary>], iteration_bounds = array<i64: 2>, scalar_prefetch = 0 : i64, scratch_operands = 2 : i64, tpu.core_type = #tpu.core_type<tc>, window_params = [{transform_indices = @transform_0, window_bounds = array<i64: 1, 8, 256>}, {pipeline_mode = #tpu.pipeline_mode<synchronous>, transform_indices = @transform_1, window_bounds = array<i64: 8, 1>}, {pipeline_mode = #tpu.pipeline_mode<synchronous>, transform_indices = @transform_2, window_bounds = array<i64: 8, 1>}, {pipeline_mode = #tpu.pipeline_mode<synchronous>, transform_indices = @transform_3, window_bounds = array<i64: 1, 256>}, {pipeline_mode = #tpu.pipeline_mode<synchronous>, transform_indices = @transform_4, window_bounds = array<i64: 1, 256>}, {pipeline_mode = #tpu.pipeline_mode<synchronous>, transform_indices = @transform_5, window_bounds = array<i64: 9, 8, 8>}, {pipeline_mode = #tpu.pipeline_mode<synchronous>, transform_indices = @transform_6, window_bounds = array<i64: 8, 1>}, {transform_indices = @transform_7, window_bounds = array<i64: 1, 8, 256>}, {pipeline_mode = #tpu.pipeline_mode<synchronous>, transform_indices = @transform_8, window_bounds = array<i64: 8, 1>}, {pipeline_mode = #tpu.pipeline_mode<synchronous>, transform_indices = @transform_9, window_bounds = array<i64: 8, 1>}]} {
    %c0 = arith.constant 0 : index
    %c0_0 = arith.constant 0 : index
    %c0_1 = arith.constant 0 : index
    %0 = vector.load %arg1[%c0, %c0_0, %c0_1] : memref<1x8x256xbf16, #tpu.memory_space<vmem>>, vector<1x8x256xbf16>
    %1 = vector.shape_cast %0 : vector<1x8x256xbf16> to vector<8x256xbf16>
    %2 = arith.extf %1 : vector<8x256xbf16> to vector<8x256xf32>
    %c0_2 = arith.constant 0 : index
    %c0_3 = arith.constant 0 : index
    %3 = vector.load %arg2[%c0_2, %c0_3] : memref<8x1xf32, #tpu.memory_space<vmem>>, vector<8x1xf32>
    %4 = vector.broadcast %3 : vector<8x1xf32> to vector<8x256xf32>
    %5 = arith.mulf %2, %4 : vector<8x256xf32>
    %c0_4 = arith.constant 0 : index
    %c0_5 = arith.constant 0 : index
    %6 = vector.load %arg3[%c0_4, %c0_5] : memref<8x1xf32, #tpu.memory_space<vmem>>, vector<8x1xf32>
    %7 = vector.broadcast %6 : vector<8x1xf32> to vector<8x256xf32>
    %8 = arith.addf %5, %7 : vector<8x256xf32>
    %cst = arith.constant 0.000000e+00 : f32
    %9 = vector.broadcast %cst : f32 to vector<8x256xf32>
    %10 = arith.maximumf %8, %9 : vector<8x256xf32>
    %c0_6 = arith.constant 0 : index
    %c0_7 = arith.constant 0 : index
    %11 = vector.load %arg4[%c0_6, %c0_7] : memref<1x256xi32, #tpu.memory_space<vmem>>, vector<1x256xi32>
    %c0_8 = arith.constant 0 : index
    %c0_9 = arith.constant 0 : index
    %12 = vector.load %arg5[%c0_8, %c0_9] : memref<1x256xi32, #tpu.memory_space<vmem>>, vector<1x256xi32>
    %c17_i32 = arith.constant 17 : i32
    %13 = tpu.dynamic_rotate %10 by %c17_i32 dim 1 : vector<8x256xf32>, i32 -> vector<8x256xf32>
    %c1_i32 = arith.constant 1 : i32
    %14 = vector.broadcast %c1_i32 : i32 to vector<1x256xi32>
    %15 = arith.cmpi sge, %11, %14 : vector<1x256xi32>
    %c17_i32_10 = arith.constant 17 : i32
    %16 = vector.broadcast %c17_i32_10 : i32 to vector<1x256xi32>
    %17 = arith.cmpi slt, %11, %16 : vector<1x256xi32>
    %18 = arith.andi %15, %17 : vector<1x256xi1>
    %c1_i32_11 = arith.constant 1 : i32
    %19 = vector.broadcast %c1_i32_11 : i32 to vector<1x256xi32>
    %20 = arith.cmpi sge, %12, %19 : vector<1x256xi32>
    %21 = arith.andi %18, %20 : vector<1x256xi1>
    %c17_i32_12 = arith.constant 17 : i32
    %22 = vector.broadcast %c17_i32_12 : i32 to vector<1x256xi32>
    %23 = arith.cmpi slt, %12, %22 : vector<1x256xi32>
    %24 = arith.andi %21, %23 : vector<1x256xi1>
    %cst_13 = arith.constant 0.000000e+00 : f32
    %25 = vector.shape_cast %24 : vector<1x256xi1> to vector<1x256xi1>
    %26 = vector.broadcast %25 : vector<1x256xi1> to vector<8x256xi1>
    %27 = vector.broadcast %cst_13 : f32 to vector<8x256xf32>
    %28 = arith.select %26, %13, %27 : vector<8x256xi1>, vector<8x256xf32>
    %29 = arith.truncf %28 : vector<8x256xf32> to vector<8x256xbf16>
    %c0_14 = arith.constant 0 : index
    %c0_15 = arith.constant 0 : index
    %c0_16 = arith.constant 0 : index
    %30 = vector.load %arg6[%c0_14, %c0_15, %c0_16] : memref<9x8x8xf32, #tpu.memory_space<vmem>>, vector<1x8x8xf32>
    %31 = vector.shape_cast %30 : vector<1x8x8xf32> to vector<8x8xf32>
    %32 = arith.truncf %31 : vector<8x8xf32> to vector<8x8xbf16>
    %cst_17 = arith.constant dense<0.000000e+00> : vector<8x256xf32>
    %33 = tpu.matmul %32, %29, %cst_17 {dimension_numbers = #tpu.dot_dimension_numbers<[1], [0], [0], [1], [0, 0, 1, 1], [], []>} : vector<8x8xbf16>, vector<8x256xbf16>, vector<8x256xf32> -> vector<8x256xf32>
    %c16_i32 = arith.constant 16 : i32
    %34 = tpu.dynamic_rotate %10 by %c16_i32 dim 1 : vector<8x256xf32>, i32 -> vector<8x256xf32>
    %c1_i32_18 = arith.constant 1 : i32
    %35 = vector.broadcast %c1_i32_18 : i32 to vector<1x256xi32>
    %36 = arith.cmpi sge, %11, %35 : vector<1x256xi32>
    %c17_i32_19 = arith.constant 17 : i32
    %37 = vector.broadcast %c17_i32_19 : i32 to vector<1x256xi32>
    %38 = arith.cmpi slt, %11, %37 : vector<1x256xi32>
    %39 = arith.andi %36, %38 : vector<1x256xi1>
    %c0_i32 = arith.constant 0 : i32
    %40 = vector.broadcast %c0_i32 : i32 to vector<1x256xi32>
    %41 = arith.cmpi sge, %12, %40 : vector<1x256xi32>
    %42 = arith.andi %39, %41 : vector<1x256xi1>
    %c16_i32_20 = arith.constant 16 : i32
    %43 = vector.broadcast %c16_i32_20 : i32 to vector<1x256xi32>
    %44 = arith.cmpi slt, %12, %43 : vector<1x256xi32>
    %45 = arith.andi %42, %44 : vector<1x256xi1>
    %cst_21 = arith.constant 0.000000e+00 : f32
    %46 = vector.shape_cast %45 : vector<1x256xi1> to vector<1x256xi1>
    %47 = vector.broadcast %46 : vector<1x256xi1> to vector<8x256xi1>
    %48 = vector.broadcast %cst_21 : f32 to vector<8x256xf32>
    %49 = arith.select %47, %34, %48 : vector<8x256xi1>, vector<8x256xf32>
    %50 = arith.truncf %49 : vector<8x256xf32> to vector<8x256xbf16>
    %c1 = arith.constant 1 : index
    %c0_22 = arith.constant 0 : index
    %c0_23 = arith.constant 0 : index
    %51 = vector.load %arg6[%c1, %c0_22, %c0_23] : memref<9x8x8xf32, #tpu.memory_space<vmem>>, vector<1x8x8xf32>
    %52 = vector.shape_cast %51 : vector<1x8x8xf32> to vector<8x8xf32>
    %53 = arith.truncf %52 : vector<8x8xf32> to vector<8x8xbf16>
    %cst_24 = arith.constant dense<0.000000e+00> : vector<8x256xf32>
    %54 = tpu.matmul %53, %50, %cst_24 {dimension_numbers = #tpu.dot_dimension_numbers<[1], [0], [0], [1], [0, 0, 1, 1], [], []>} : vector<8x8xbf16>, vector<8x256xbf16>, vector<8x256xf32> -> vector<8x256xf32>
    %55 = arith.addf %33, %54 : vector<8x256xf32>
    %c15_i32 = arith.constant 15 : i32
    %56 = tpu.dynamic_rotate %10 by %c15_i32 dim 1 : vector<8x256xf32>, i32 -> vector<8x256xf32>
    %c1_i32_25 = arith.constant 1 : i32
    %57 = vector.broadcast %c1_i32_25 : i32 to vector<1x256xi32>
    %58 = arith.cmpi sge, %11, %57 : vector<1x256xi32>
    %c17_i32_26 = arith.constant 17 : i32
    %59 = vector.broadcast %c17_i32_26 : i32 to vector<1x256xi32>
    %60 = arith.cmpi slt, %11, %59 : vector<1x256xi32>
    %61 = arith.andi %58, %60 : vector<1x256xi1>
    %c-1_i32 = arith.constant -1 : i32
    %62 = vector.broadcast %c-1_i32 : i32 to vector<1x256xi32>
    %63 = arith.cmpi sge, %12, %62 : vector<1x256xi32>
    %64 = arith.andi %61, %63 : vector<1x256xi1>
    %c15_i32_27 = arith.constant 15 : i32
    %65 = vector.broadcast %c15_i32_27 : i32 to vector<1x256xi32>
    %66 = arith.cmpi slt, %12, %65 : vector<1x256xi32>
    %67 = arith.andi %64, %66 : vector<1x256xi1>
    %cst_28 = arith.constant 0.000000e+00 : f32
    %68 = vector.shape_cast %67 : vector<1x256xi1> to vector<1x256xi1>
    %69 = vector.broadcast %68 : vector<1x256xi1> to vector<8x256xi1>
    %70 = vector.broadcast %cst_28 : f32 to vector<8x256xf32>
    %71 = arith.select %69, %56, %70 : vector<8x256xi1>, vector<8x256xf32>
    %72 = arith.truncf %71 : vector<8x256xf32> to vector<8x256xbf16>
    %c2 = arith.constant 2 : index
    %c0_29 = arith.constant 0 : index
    %c0_30 = arith.constant 0 : index
    %73 = vector.load %arg6[%c2, %c0_29, %c0_30] : memref<9x8x8xf32, #tpu.memory_space<vmem>>, vector<1x8x8xf32>
    %74 = vector.shape_cast %73 : vector<1x8x8xf32> to vector<8x8xf32>
    %75 = arith.truncf %74 : vector<8x8xf32> to vector<8x8xbf16>
    %cst_31 = arith.constant dense<0.000000e+00> : vector<8x256xf32>
    %76 = tpu.matmul %75, %72, %cst_31 {dimension_numbers = #tpu.dot_dimension_numbers<[1], [0], [0], [1], [0, 0, 1, 1], [], []>} : vector<8x8xbf16>, vector<8x256xbf16>, vector<8x256xf32> -> vector<8x256xf32>
    %77 = arith.addf %55, %76 : vector<8x256xf32>
    %c1_i32_32 = arith.constant 1 : i32
    %78 = tpu.dynamic_rotate %10 by %c1_i32_32 dim 1 : vector<8x256xf32>, i32 -> vector<8x256xf32>
    %c0_i32_33 = arith.constant 0 : i32
    %79 = vector.broadcast %c0_i32_33 : i32 to vector<1x256xi32>
    %80 = arith.cmpi sge, %11, %79 : vector<1x256xi32>
    %c16_i32_34 = arith.constant 16 : i32
    %81 = vector.broadcast %c16_i32_34 : i32 to vector<1x256xi32>
    %82 = arith.cmpi slt, %11, %81 : vector<1x256xi32>
    %83 = arith.andi %80, %82 : vector<1x256xi1>
    %c1_i32_35 = arith.constant 1 : i32
    %84 = vector.broadcast %c1_i32_35 : i32 to vector<1x256xi32>
    %85 = arith.cmpi sge, %12, %84 : vector<1x256xi32>
    %86 = arith.andi %83, %85 : vector<1x256xi1>
    %c17_i32_36 = arith.constant 17 : i32
    %87 = vector.broadcast %c17_i32_36 : i32 to vector<1x256xi32>
    %88 = arith.cmpi slt, %12, %87 : vector<1x256xi32>
    %89 = arith.andi %86, %88 : vector<1x256xi1>
    %cst_37 = arith.constant 0.000000e+00 : f32
    %90 = vector.shape_cast %89 : vector<1x256xi1> to vector<1x256xi1>
    %91 = vector.broadcast %90 : vector<1x256xi1> to vector<8x256xi1>
    %92 = vector.broadcast %cst_37 : f32 to vector<8x256xf32>
    %93 = arith.select %91, %78, %92 : vector<8x256xi1>, vector<8x256xf32>
    %94 = arith.truncf %93 : vector<8x256xf32> to vector<8x256xbf16>
    %c3 = arith.constant 3 : index
    %c0_38 = arith.constant 0 : index
    %c0_39 = arith.constant 0 : index
    %95 = vector.load %arg6[%c3, %c0_38, %c0_39] : memref<9x8x8xf32, #tpu.memory_space<vmem>>, vector<1x8x8xf32>
    %96 = vector.shape_cast %95 : vector<1x8x8xf32> to vector<8x8xf32>
    %97 = arith.truncf %96 : vector<8x8xf32> to vector<8x8xbf16>
    %cst_40 = arith.constant dense<0.000000e+00> : vector<8x256xf32>
    %98 = tpu.matmul %97, %94, %cst_40 {dimension_numbers = #tpu.dot_dimension_numbers<[1], [0], [0], [1], [0, 0, 1, 1], [], []>} : vector<8x8xbf16>, vector<8x256xbf16>, vector<8x256xf32> -> vector<8x256xf32>
    %99 = arith.addf %77, %98 : vector<8x256xf32>
    %c0_i32_41 = arith.constant 0 : i32
    %100 = vector.broadcast %c0_i32_41 : i32 to vector<1x256xi32>
    %101 = arith.cmpi sge, %11, %100 : vector<1x256xi32>
    %c16_i32_42 = arith.constant 16 : i32
    %102 = vector.broadcast %c16_i32_42 : i32 to vector<1x256xi32>
    %103 = arith.cmpi slt, %11, %102 : vector<1x256xi32>
    %104 = arith.andi %101, %103 : vector<1x256xi1>
    %c0_i32_43 = arith.constant 0 : i32
    %105 = vector.broadcast %c0_i32_43 : i32 to vector<1x256xi32>
    %106 = arith.cmpi sge, %12, %105 : vector<1x256xi32>
    %107 = arith.andi %104, %106 : vector<1x256xi1>
    %c16_i32_44 = arith.constant 16 : i32
    %108 = vector.broadcast %c16_i32_44 : i32 to vector<1x256xi32>
    %109 = arith.cmpi slt, %12, %108 : vector<1x256xi32>
    %110 = arith.andi %107, %109 : vector<1x256xi1>
    %cst_45 = arith.constant 0.000000e+00 : f32
    %111 = vector.shape_cast %110 : vector<1x256xi1> to vector<1x256xi1>
    %112 = vector.broadcast %111 : vector<1x256xi1> to vector<8x256xi1>
    %113 = vector.broadcast %cst_45 : f32 to vector<8x256xf32>
    %114 = arith.select %112, %10, %113 : vector<8x256xi1>, vector<8x256xf32>
    %115 = arith.truncf %114 : vector<8x256xf32> to vector<8x256xbf16>
    %c4 = arith.constant 4 : index
    %c0_46 = arith.constant 0 : index
    %c0_47 = arith.constant 0 : index
    %116 = vector.load %arg6[%c4, %c0_46, %c0_47] : memref<9x8x8xf32, #tpu.memory_space<vmem>>, vector<1x8x8xf32>
    %117 = vector.shape_cast %116 : vector<1x8x8xf32> to vector<8x8xf32>
    %118 = arith.truncf %117 : vector<8x8xf32> to vector<8x8xbf16>
    %cst_48 = arith.constant dense<0.000000e+00> : vector<8x256xf32>
    %119 = tpu.matmul %118, %115, %cst_48 {dimension_numbers = #tpu.dot_dimension_numbers<[1], [0], [0], [1], [0, 0, 1, 1], [], []>} : vector<8x8xbf16>, vector<8x256xbf16>, vector<8x256xf32> -> vector<8x256xf32>
    %120 = arith.addf %99, %119 : vector<8x256xf32>
    %c255_i32 = arith.constant 255 : i32
    %121 = tpu.dynamic_rotate %10 by %c255_i32 dim 1 : vector<8x256xf32>, i32 -> vector<8x256xf32>
    %c0_i32_49 = arith.constant 0 : i32
    %122 = vector.broadcast %c0_i32_49 : i32 to vector<1x256xi32>
    %123 = arith.cmpi sge, %11, %122 : vector<1x256xi32>
    %c16_i32_50 = arith.constant 16 : i32
    %124 = vector.broadcast %c16_i32_50 : i32 to vector<1x256xi32>
    %125 = arith.cmpi slt, %11, %124 : vector<1x256xi32>
    %126 = arith.andi %123, %125 : vector<1x256xi1>
    %c-1_i32_51 = arith.constant -1 : i32
    %127 = vector.broadcast %c-1_i32_51 : i32 to vector<1x256xi32>
    %128 = arith.cmpi sge, %12, %127 : vector<1x256xi32>
    %129 = arith.andi %126, %128 : vector<1x256xi1>
    %c15_i32_52 = arith.constant 15 : i32
    %130 = vector.broadcast %c15_i32_52 : i32 to vector<1x256xi32>
    %131 = arith.cmpi slt, %12, %130 : vector<1x256xi32>
    %132 = arith.andi %129, %131 : vector<1x256xi1>
    %cst_53 = arith.constant 0.000000e+00 : f32
    %133 = vector.shape_cast %132 : vector<1x256xi1> to vector<1x256xi1>
    %134 = vector.broadcast %133 : vector<1x256xi1> to vector<8x256xi1>
    %135 = vector.broadcast %cst_53 : f32 to vector<8x256xf32>
    %136 = arith.select %134, %121, %135 : vector<8x256xi1>, vector<8x256xf32>
    %137 = arith.truncf %136 : vector<8x256xf32> to vector<8x256xbf16>
    %c5 = arith.constant 5 : index
    %c0_54 = arith.constant 0 : index
    %c0_55 = arith.constant 0 : index
    %138 = vector.load %arg6[%c5, %c0_54, %c0_55] : memref<9x8x8xf32, #tpu.memory_space<vmem>>, vector<1x8x8xf32>
    %139 = vector.shape_cast %138 : vector<1x8x8xf32> to vector<8x8xf32>
    %140 = arith.truncf %139 : vector<8x8xf32> to vector<8x8xbf16>
    %cst_56 = arith.constant dense<0.000000e+00> : vector<8x256xf32>
    %141 = tpu.matmul %140, %137, %cst_56 {dimension_numbers = #tpu.dot_dimension_numbers<[1], [0], [0], [1], [0, 0, 1, 1], [], []>} : vector<8x8xbf16>, vector<8x256xbf16>, vector<8x256xf32> -> vector<8x256xf32>
    %142 = arith.addf %120, %141 : vector<8x256xf32>
    %c241_i32 = arith.constant 241 : i32
    %143 = tpu.dynamic_rotate %10 by %c241_i32 dim 1 : vector<8x256xf32>, i32 -> vector<8x256xf32>
    %c-1_i32_57 = arith.constant -1 : i32
    %144 = vector.broadcast %c-1_i32_57 : i32 to vector<1x256xi32>
    %145 = arith.cmpi sge, %11, %144 : vector<1x256xi32>
    %c15_i32_58 = arith.constant 15 : i32
    %146 = vector.broadcast %c15_i32_58 : i32 to vector<1x256xi32>
    %147 = arith.cmpi slt, %11, %146 : vector<1x256xi32>
    %148 = arith.andi %145, %147 : vector<1x256xi1>
    %c1_i32_59 = arith.constant 1 : i32
    %149 = vector.broadcast %c1_i32_59 : i32 to vector<1x256xi32>
    %150 = arith.cmpi sge, %12, %149 : vector<1x256xi32>
    %151 = arith.andi %148, %150 : vector<1x256xi1>
    %c17_i32_60 = arith.constant 17 : i32
    %152 = vector.broadcast %c17_i32_60 : i32 to vector<1x256xi32>
    %153 = arith.cmpi slt, %12, %152 : vector<1x256xi32>
    %154 = arith.andi %151, %153 : vector<1x256xi1>
    %cst_61 = arith.constant 0.000000e+00 : f32
    %155 = vector.shape_cast %154 : vector<1x256xi1> to vector<1x256xi1>
    %156 = vector.broadcast %155 : vector<1x256xi1> to vector<8x256xi1>
    %157 = vector.broadcast %cst_61 : f32 to vector<8x256xf32>
    %158 = arith.select %156, %143, %157 : vector<8x256xi1>, vector<8x256xf32>
    %159 = arith.truncf %158 : vector<8x256xf32> to vector<8x256xbf16>
    %c6 = arith.constant 6 : index
    %c0_62 = arith.constant 0 : index
    %c0_63 = arith.constant 0 : index
    %160 = vector.load %arg6[%c6, %c0_62, %c0_63] : memref<9x8x8xf32, #tpu.memory_space<vmem>>, vector<1x8x8xf32>
    %161 = vector.shape_cast %160 : vector<1x8x8xf32> to vector<8x8xf32>
    %162 = arith.truncf %161 : vector<8x8xf32> to vector<8x8xbf16>
    %cst_64 = arith.constant dense<0.000000e+00> : vector<8x256xf32>
    %163 = tpu.matmul %162, %159, %cst_64 {dimension_numbers = #tpu.dot_dimension_numbers<[1], [0], [0], [1], [0, 0, 1, 1], [], []>} : vector<8x8xbf16>, vector<8x256xbf16>, vector<8x256xf32> -> vector<8x256xf32>
    %164 = arith.addf %142, %163 : vector<8x256xf32>
    %c240_i32 = arith.constant 240 : i32
    %165 = tpu.dynamic_rotate %10 by %c240_i32 dim 1 : vector<8x256xf32>, i32 -> vector<8x256xf32>
    %c-1_i32_65 = arith.constant -1 : i32
    %166 = vector.broadcast %c-1_i32_65 : i32 to vector<1x256xi32>
    %167 = arith.cmpi sge, %11, %166 : vector<1x256xi32>
    %c15_i32_66 = arith.constant 15 : i32
    %168 = vector.broadcast %c15_i32_66 : i32 to vector<1x256xi32>
    %169 = arith.cmpi slt, %11, %168 : vector<1x256xi32>
    %170 = arith.andi %167, %169 : vector<1x256xi1>
    %c0_i32_67 = arith.constant 0 : i32
    %171 = vector.broadcast %c0_i32_67 : i32 to vector<1x256xi32>
    %172 = arith.cmpi sge, %12, %171 : vector<1x256xi32>
    %173 = arith.andi %170, %172 : vector<1x256xi1>
    %c16_i32_68 = arith.constant 16 : i32
    %174 = vector.broadcast %c16_i32_68 : i32 to vector<1x256xi32>
    %175 = arith.cmpi slt, %12, %174 : vector<1x256xi32>
    %176 = arith.andi %173, %175 : vector<1x256xi1>
    %cst_69 = arith.constant 0.000000e+00 : f32
    %177 = vector.shape_cast %176 : vector<1x256xi1> to vector<1x256xi1>
    %178 = vector.broadcast %177 : vector<1x256xi1> to vector<8x256xi1>
    %179 = vector.broadcast %cst_69 : f32 to vector<8x256xf32>
    %180 = arith.select %178, %165, %179 : vector<8x256xi1>, vector<8x256xf32>
    %181 = arith.truncf %180 : vector<8x256xf32> to vector<8x256xbf16>
    %c7 = arith.constant 7 : index
    %c0_70 = arith.constant 0 : index
    %c0_71 = arith.constant 0 : index
    %182 = vector.load %arg6[%c7, %c0_70, %c0_71] : memref<9x8x8xf32, #tpu.memory_space<vmem>>, vector<1x8x8xf32>
    %183 = vector.shape_cast %182 : vector<1x8x8xf32> to vector<8x8xf32>
    %184 = arith.truncf %183 : vector<8x8xf32> to vector<8x8xbf16>
    %cst_72 = arith.constant dense<0.000000e+00> : vector<8x256xf32>
    %185 = tpu.matmul %184, %181, %cst_72 {dimension_numbers = #tpu.dot_dimension_numbers<[1], [0], [0], [1], [0, 0, 1, 1], [], []>} : vector<8x8xbf16>, vector<8x256xbf16>, vector<8x256xf32> -> vector<8x256xf32>
    %186 = arith.addf %164, %185 : vector<8x256xf32>
    %c239_i32 = arith.constant 239 : i32
    %187 = tpu.dynamic_rotate %10 by %c239_i32 dim 1 : vector<8x256xf32>, i32 -> vector<8x256xf32>
    %c-1_i32_73 = arith.constant -1 : i32
    %188 = vector.broadcast %c-1_i32_73 : i32 to vector<1x256xi32>
    %189 = arith.cmpi sge, %11, %188 : vector<1x256xi32>
    %c15_i32_74 = arith.constant 15 : i32
    %190 = vector.broadcast %c15_i32_74 : i32 to vector<1x256xi32>
    %191 = arith.cmpi slt, %11, %190 : vector<1x256xi32>
    %192 = arith.andi %189, %191 : vector<1x256xi1>
    %c-1_i32_75 = arith.constant -1 : i32
    %193 = vector.broadcast %c-1_i32_75 : i32 to vector<1x256xi32>
    %194 = arith.cmpi sge, %12, %193 : vector<1x256xi32>
    %195 = arith.andi %192, %194 : vector<1x256xi1>
    %c15_i32_76 = arith.constant 15 : i32
    %196 = vector.broadcast %c15_i32_76 : i32 to vector<1x256xi32>
    %197 = arith.cmpi slt, %12, %196 : vector<1x256xi32>
    %198 = arith.andi %195, %197 : vector<1x256xi1>
    %cst_77 = arith.constant 0.000000e+00 : f32
    %199 = vector.shape_cast %198 : vector<1x256xi1> to vector<1x256xi1>
    %200 = vector.broadcast %199 : vector<1x256xi1> to vector<8x256xi1>
    %201 = vector.broadcast %cst_77 : f32 to vector<8x256xf32>
    %202 = arith.select %200, %187, %201 : vector<8x256xi1>, vector<8x256xf32>
    %203 = arith.truncf %202 : vector<8x256xf32> to vector<8x256xbf16>
    %c8 = arith.constant 8 : index
    %c0_78 = arith.constant 0 : index
    %c0_79 = arith.constant 0 : index
    %204 = vector.load %arg6[%c8, %c0_78, %c0_79] : memref<9x8x8xf32, #tpu.memory_space<vmem>>, vector<1x8x8xf32>
    %205 = vector.shape_cast %204 : vector<1x8x8xf32> to vector<8x8xf32>
    %206 = arith.truncf %205 : vector<8x8xf32> to vector<8x8xbf16>
    %cst_80 = arith.constant dense<0.000000e+00> : vector<8x256xf32>
    %207 = tpu.matmul %206, %203, %cst_80 {dimension_numbers = #tpu.dot_dimension_numbers<[1], [0], [0], [1], [0, 0, 1, 1], [], []>} : vector<8x8xbf16>, vector<8x256xbf16>, vector<8x256xf32> -> vector<8x256xf32>
    %208 = arith.addf %186, %207 : vector<8x256xf32>
    %c0_81 = arith.constant 0 : index
    %c0_82 = arith.constant 0 : index
    %209 = vector.load %arg7[%c0_81, %c0_82] : memref<8x1xf32, #tpu.memory_space<vmem>>, vector<8x1xf32>
    %210 = vector.broadcast %209 : vector<8x1xf32> to vector<8x256xf32>
    %211 = arith.addf %208, %210 : vector<8x256xf32>
    %212 = arith.truncf %211 : vector<8x256xf32> to vector<8x256xbf16>
    %c0_83 = arith.constant 0 : index
    %c0_84 = arith.constant 0 : index
    %c0_85 = arith.constant 0 : index
    %213 = vector.load %arg8[%c0_83, %c0_84, %c0_85] : memref<1x8x256xbf16, #tpu.memory_space<vmem>>, vector<1x8x256xbf16>
    %214 = vector.shape_cast %213 : vector<1x8x256xbf16> to vector<8x256xbf16>
    %215 = vector.shape_cast %212 : vector<8x256xbf16> to vector<1x8x256xbf16>
    tpu.vector_store %arg8[%c0_83, %c0_84, %c0_85], %215 {strides = array<i32>} : memref<1x8x256xbf16, #tpu.memory_space<vmem>>, vector<1x8x256xbf16>,
    %c0_i32_86 = arith.constant 0 : i32
    %216 = arith.cmpi eq, %arg0, %c0_i32_86 : i32
    %217 = arith.extui %216 : i1 to i32
    %c0_i32_87 = arith.constant 0 : i32
    %218 = arith.cmpi ne, %217, %c0_i32_87 : i32
    scf.if %218 {
      %cst_100 = arith.constant 0.000000e+00 : f32
      %233 = vector.broadcast %cst_100 : f32 to vector<8x1xf32>
      %c0_101 = arith.constant 0 : index
      %c0_102 = arith.constant 0 : index
      %234 = vector.load %arg11[%c0_101, %c0_102] : memref<8x1xf32, #tpu.memory_space<vmem>>, vector<8x1xf32>
      tpu.vector_store %arg11[%c0_101, %c0_102], %233 {strides = array<i32>} : memref<8x1xf32, #tpu.memory_space<vmem>>, vector<8x1xf32>,
      %cst_103 = arith.constant 0.000000e+00 : f32
      %235 = vector.broadcast %cst_103 : f32 to vector<8x1xf32>
      %c0_104 = arith.constant 0 : index
      %c0_105 = arith.constant 0 : index
      %236 = vector.load %arg12[%c0_104, %c0_105] : memref<8x1xf32, #tpu.memory_space<vmem>>, vector<8x1xf32>
      tpu.vector_store %arg12[%c0_104, %c0_105], %235 {strides = array<i32>} : memref<8x1xf32, #tpu.memory_space<vmem>>, vector<8x1xf32>,
    } else {
    }
    %c0_88 = arith.constant 0 : index
    %c0_89 = arith.constant 0 : index
    %219 = vector.load %arg11[%c0_88, %c0_89] : memref<8x1xf32, #tpu.memory_space<vmem>>, vector<8x1xf32>
    %cst_90 = arith.constant dense<0.000000e+00> : vector<8xf32>
    %220 = vector.multi_reduction <add>, %211, %cst_90 [1] : vector<8x256xf32> to vector<8xf32>
    %221 = vector.shape_cast %220 : vector<8xf32> to vector<8x1xf32>
    %222 = arith.addf %219, %221 : vector<8x1xf32>
    %c0_91 = arith.constant 0 : index
    %c0_92 = arith.constant 0 : index
    %223 = vector.load %arg11[%c0_91, %c0_92] : memref<8x1xf32, #tpu.memory_space<vmem>>, vector<8x1xf32>
    tpu.vector_store %arg11[%c0_91, %c0_92], %222 {strides = array<i32>} : memref<8x1xf32, #tpu.memory_space<vmem>>, vector<8x1xf32>,
    %c0_93 = arith.constant 0 : index
    %c0_94 = arith.constant 0 : index
    %224 = vector.load %arg12[%c0_93, %c0_94] : memref<8x1xf32, #tpu.memory_space<vmem>>, vector<8x1xf32>
    %225 = arith.mulf %211, %211 : vector<8x256xf32>
    %cst_95 = arith.constant dense<0.000000e+00> : vector<8xf32>
    %226 = vector.multi_reduction <add>, %225, %cst_95 [1] : vector<8x256xf32> to vector<8xf32>
    %227 = vector.shape_cast %226 : vector<8xf32> to vector<8x1xf32>
    %228 = arith.addf %224, %227 : vector<8x1xf32>
    %c0_96 = arith.constant 0 : index
    %c0_97 = arith.constant 0 : index
    %229 = vector.load %arg12[%c0_96, %c0_97] : memref<8x1xf32, #tpu.memory_space<vmem>>, vector<8x1xf32>
    tpu.vector_store %arg12[%c0_96, %c0_97], %228 {strides = array<i32>} : memref<8x1xf32, #tpu.memory_space<vmem>>, vector<8x1xf32>,
    %c1_i32_98 = arith.constant 1 : i32
    %230 = arith.cmpi eq, %arg0, %c1_i32_98 : i32
    %231 = arith.extui %230 : i1 to i32
    %c0_i32_99 = arith.constant 0 : i32
    %232 = arith.cmpi ne, %231, %c0_i32_99 : i32
    scf.if %232 {
      %c0_100 = arith.constant 0 : index
      %c0_101 = arith.constant 0 : index
      %233 = vector.load %arg11[%c0_100, %c0_101] : memref<8x1xf32, #tpu.memory_space<vmem>>, vector<8x1xf32>
      %c0_102 = arith.constant 0 : index
      %c0_103 = arith.constant 0 : index
      %234 = vector.load %arg9[%c0_102, %c0_103] : memref<8x1xf32, #tpu.memory_space<vmem>>, vector<8x1xf32>
      tpu.vector_store %arg9[%c0_102, %c0_103], %233 {strides = array<i32>} : memref<8x1xf32, #tpu.memory_space<vmem>>, vector<8x1xf32>,
      %c0_104 = arith.constant 0 : index
      %c0_105 = arith.constant 0 : index
      %235 = vector.load %arg12[%c0_104, %c0_105] : memref<8x1xf32, #tpu.memory_space<vmem>>, vector<8x1xf32>
      %c0_106 = arith.constant 0 : index
      %c0_107 = arith.constant 0 : index
      %236 = vector.load %arg10[%c0_106, %c0_107] : memref<8x1xf32, #tpu.memory_space<vmem>>, vector<8x1xf32>
      tpu.vector_store %arg10[%c0_106, %c0_107], %235 {strides = array<i32>} : memref<8x1xf32, #tpu.memory_space<vmem>>, vector<8x1xf32>,
    } else {
    }
    return
  }
  func.func @transform_0(%arg0: i32) -> (i32, i32, i32) {
    %c0_i32 = arith.constant 0 : i32
    %c0_i32_0 = arith.constant 0 : i32
    %c0_i32_1 = arith.constant 0 : i32
    return %arg0, %c0_i32, %c0_i32_0 : i32, i32, i32
  }
  func.func @transform_1(%arg0: i32) -> (i32, i32) {
    %c0_i32 = arith.constant 0 : i32
    %c0_i32_0 = arith.constant 0 : i32
    %c0_i32_1 = arith.constant 0 : i32
    return %c0_i32, %c0_i32_0 : i32, i32
  }
  func.func @transform_2(%arg0: i32) -> (i32, i32) {
    %c0_i32 = arith.constant 0 : i32
    %c0_i32_0 = arith.constant 0 : i32
    %c0_i32_1 = arith.constant 0 : i32
    return %c0_i32, %c0_i32_0 : i32, i32
  }
  func.func @transform_3(%arg0: i32) -> (i32, i32) {
    %c0_i32 = arith.constant 0 : i32
    %c0_i32_0 = arith.constant 0 : i32
    %c0_i32_1 = arith.constant 0 : i32
    return %c0_i32, %c0_i32_0 : i32, i32
  }
  func.func @transform_4(%arg0: i32) -> (i32, i32) {
    %c0_i32 = arith.constant 0 : i32
    %c0_i32_0 = arith.constant 0 : i32
    %c0_i32_1 = arith.constant 0 : i32
    return %c0_i32, %c0_i32_0 : i32, i32
  }
  func.func @transform_5(%arg0: i32) -> (i32, i32, i32) {
    %c0_i32 = arith.constant 0 : i32
    %c0_i32_0 = arith.constant 0 : i32
    %c0_i32_1 = arith.constant 0 : i32
    %c0_i32_2 = arith.constant 0 : i32
    return %c0_i32, %c0_i32_0, %c0_i32_1 : i32, i32, i32
  }
  func.func @transform_6(%arg0: i32) -> (i32, i32) {
    %c0_i32 = arith.constant 0 : i32
    %c0_i32_0 = arith.constant 0 : i32
    %c0_i32_1 = arith.constant 0 : i32
    return %c0_i32, %c0_i32_0 : i32, i32
  }
  func.func @transform_7(%arg0: i32) -> (i32, i32, i32) {
    %c0_i32 = arith.constant 0 : i32
    %c0_i32_0 = arith.constant 0 : i32
    %c0_i32_1 = arith.constant 0 : i32
    return %arg0, %c0_i32, %c0_i32_0 : i32, i32, i32
  }
  func.func @transform_8(%arg0: i32) -> (i32, i32) {
    %c0_i32 = arith.constant 0 : i32
    %c0_i32_0 = arith.constant 0 : i32
    %c0_i32_1 = arith.constant 0 : i32
    return %c0_i32, %c0_i32_0 : i32, i32
  }
  func.func @transform_9(%arg0: i32) -> (i32, i32) {
    %c0_i32 = arith.constant 0 : i32
    %c0_i32_0 = arith.constant 0 : i32
    %c0_i32_1 = arith.constant 0 : i32
    return %c0_i32, %c0_i32_0 : i32, i32
  }
}

module attributes {stable_mosaic.version = 11 : i64} {
  func.func @kernel(%arg0: i32, %arg1: memref<1x8x256xbf16, #tpu.memory_space<vmem>>, %arg2: memref<8x1xf32, #tpu.memory_space<vmem>>, %arg3: memref<8x1xf32, #tpu.memory_space<vmem>>, %arg4: memref<1x4x256xbf16, #tpu.memory_space<vmem>>, %arg5: memref<8x4xbf16, #tpu.memory_space<vmem>>, %arg6: memref<8x1xf32, #tpu.memory_space<vmem>>, %arg7: memref<1x8x256xf32, #tpu.memory_space<vmem>>) attributes {dimension_semantics = [#tpu.dimension_semantics<parallel>], iteration_bounds = array<i64: 2>, scalar_prefetch = 0 : i64, scratch_operands = 0 : i64, tpu.core_type = #tpu.core_type<tc>, window_params = [{transform_indices = @transform_0, window_bounds = array<i64: 1, 8, 256>}, {pipeline_mode = #tpu.pipeline_mode<synchronous>, transform_indices = @transform_1, window_bounds = array<i64: 8, 1>}, {pipeline_mode = #tpu.pipeline_mode<synchronous>, transform_indices = @transform_2, window_bounds = array<i64: 8, 1>}, {transform_indices = @transform_3, window_bounds = array<i64: 1, 4, 256>}, {pipeline_mode = #tpu.pipeline_mode<synchronous>, transform_indices = @transform_4, window_bounds = array<i64: 8, 4>}, {pipeline_mode = #tpu.pipeline_mode<synchronous>, transform_indices = @transform_5, window_bounds = array<i64: 8, 1>}, {transform_indices = @transform_6, window_bounds = array<i64: 1, 8, 256>}]} {
    %c0 = arith.constant 0 : index
    %c0_0 = arith.constant 0 : index
    %0 = vector.load %arg5[%c0, %c0_0] : memref<8x4xbf16, #tpu.memory_space<vmem>>, vector<8x4xbf16>
    %c0_1 = arith.constant 0 : index
    %c0_2 = arith.constant 0 : index
    %c0_3 = arith.constant 0 : index
    %1 = vector.load %arg4[%c0_1, %c0_2, %c0_3] : memref<1x4x256xbf16, #tpu.memory_space<vmem>>, vector<1x4x256xbf16>
    %2 = vector.shape_cast %1 : vector<1x4x256xbf16> to vector<4x256xbf16>
    %cst = arith.constant dense<0.000000e+00> : vector<8x256xf32>
    %3 = tpu.matmul %0, %2, %cst {dimension_numbers = #tpu.dot_dimension_numbers<[1], [0], [0], [1], [0, 0, 1, 1], [], []>} : vector<8x4xbf16>, vector<4x256xbf16>, vector<8x256xf32> -> vector<8x256xf32>
    %c0_4 = arith.constant 0 : index
    %c0_5 = arith.constant 0 : index
    %4 = vector.load %arg6[%c0_4, %c0_5] : memref<8x1xf32, #tpu.memory_space<vmem>>, vector<8x1xf32>
    %5 = vector.broadcast %4 : vector<8x1xf32> to vector<8x256xf32>
    %6 = arith.addf %3, %5 : vector<8x256xf32>
    %c0_6 = arith.constant 0 : index
    %c0_7 = arith.constant 0 : index
    %c0_8 = arith.constant 0 : index
    %7 = vector.load %arg1[%c0_6, %c0_7, %c0_8] : memref<1x8x256xbf16, #tpu.memory_space<vmem>>, vector<1x8x256xbf16>
    %8 = vector.shape_cast %7 : vector<1x8x256xbf16> to vector<8x256xbf16>
    %9 = arith.extf %8 : vector<8x256xbf16> to vector<8x256xf32>
    %c0_9 = arith.constant 0 : index
    %c0_10 = arith.constant 0 : index
    %10 = vector.load %arg2[%c0_9, %c0_10] : memref<8x1xf32, #tpu.memory_space<vmem>>, vector<8x1xf32>
    %11 = vector.broadcast %10 : vector<8x1xf32> to vector<8x256xf32>
    %12 = arith.mulf %9, %11 : vector<8x256xf32>
    %c0_11 = arith.constant 0 : index
    %c0_12 = arith.constant 0 : index
    %13 = vector.load %arg3[%c0_11, %c0_12] : memref<8x1xf32, #tpu.memory_space<vmem>>, vector<8x1xf32>
    %14 = vector.broadcast %13 : vector<8x1xf32> to vector<8x256xf32>
    %15 = arith.addf %12, %14 : vector<8x256xf32>
    %16 = arith.addf %15, %6 : vector<8x256xf32>
    %cst_13 = arith.constant 0.000000e+00 : f32
    %17 = vector.broadcast %cst_13 : f32 to vector<8x256xf32>
    %18 = arith.maximumf %16, %17 : vector<8x256xf32>
    %c0_14 = arith.constant 0 : index
    %c0_15 = arith.constant 0 : index
    %c0_16 = arith.constant 0 : index
    %19 = vector.load %arg7[%c0_14, %c0_15, %c0_16] : memref<1x8x256xf32, #tpu.memory_space<vmem>>, vector<1x8x256xf32>
    %20 = vector.shape_cast %19 : vector<1x8x256xf32> to vector<8x256xf32>
    %21 = vector.shape_cast %18 : vector<8x256xf32> to vector<1x8x256xf32>
    tpu.vector_store %arg7[%c0_14, %c0_15, %c0_16], %21 {strides = array<i32>} : memref<1x8x256xf32, #tpu.memory_space<vmem>>, vector<1x8x256xf32>,
    return
  }
  func.func @transform_0(%arg0: i32) -> (i32, i32, i32) {
    %c0_i32 = arith.constant 0 : i32
    %c0_i32_0 = arith.constant 0 : i32
    %c0_i32_1 = arith.constant 0 : i32
    return %arg0, %c0_i32, %c0_i32_0 : i32, i32, i32
  }
  func.func @transform_1(%arg0: i32) -> (i32, i32) {
    %c0_i32 = arith.constant 0 : i32
    %c0_i32_0 = arith.constant 0 : i32
    %c0_i32_1 = arith.constant 0 : i32
    return %c0_i32, %c0_i32_0 : i32, i32
  }
  func.func @transform_2(%arg0: i32) -> (i32, i32) {
    %c0_i32 = arith.constant 0 : i32
    %c0_i32_0 = arith.constant 0 : i32
    %c0_i32_1 = arith.constant 0 : i32
    return %c0_i32, %c0_i32_0 : i32, i32
  }
  func.func @transform_3(%arg0: i32) -> (i32, i32, i32) {
    %c0_i32 = arith.constant 0 : i32
    %c0_i32_0 = arith.constant 0 : i32
    %c0_i32_1 = arith.constant 0 : i32
    return %arg0, %c0_i32, %c0_i32_0 : i32, i32, i32
  }
  func.func @transform_4(%arg0: i32) -> (i32, i32) {
    %c0_i32 = arith.constant 0 : i32
    %c0_i32_0 = arith.constant 0 : i32
    %c0_i32_1 = arith.constant 0 : i32
    return %c0_i32, %c0_i32_0 : i32, i32
  }
  func.func @transform_5(%arg0: i32) -> (i32, i32) {
    %c0_i32 = arith.constant 0 : i32
    %c0_i32_0 = arith.constant 0 : i32
    %c0_i32_1 = arith.constant 0 : i32
    return %c0_i32, %c0_i32_0 : i32, i32
  }
  func.func @transform_6(%arg0: i32) -> (i32, i32, i32) {
    %c0_i32 = arith.constant 0 : i32
    %c0_i32_0 = arith.constant 0 : i32
    %c0_i32_1 = arith.constant 0 : i32
    return %arg0, %c0_i32, %c0_i32_0 : i32, i32, i32
  }
}

</mosaic_0001>

<llo_original>
// kernel: residual_forward.5
$region0: #{residual_forward.5}
  #allocation0 [shape = 'u32[]', space=smem, size = 0x4, offset = 0x4, fixed_abs, tag = 'smem constant byte address 0x4 - core index']
  #allocation1 [shape = 'u32[72,128]{1,0:T(1,128)}', space=vmem, size = 0x9000, scoped, tag = 'internal scratch']
  %s0 = inlined_call_operand.vmem [shape: bf16[2,8,256], index: 0, kind: input, shape index: {}]
  %s1 = inlined_call_operand.vmem [shape: f32[8,1], index: 1, kind: input, shape index: {}]
  %s2 = inlined_call_operand.vmem [shape: f32[8,1], index: 2, kind: input, shape index: {}]
  %s3 = inlined_call_operand.vmem [shape: bf16[2,4,256], index: 3, kind: input, shape index: {}]
  %s4 = inlined_call_operand.vmem [shape: bf16[8,4], index: 4, kind: input, shape index: {}]
  %s5 = inlined_call_operand.vmem [shape: f32[8,1], index: 5, kind: input, shape index: {}]
  %s6 = inlined_call_operand.vmem [shape: f32[2,8,256], index: 6, kind: output, shape index: {}]
  %s7 = sld [smem:[#allocation0]]
  $region57: #{residual_forward.5} parent=0
    _
  %s9 = ssub.s32 1, %s7
  %s10 = scalar_select 0, %s9, %s7
  loop: start=0, step=1, limit=4
  $region2: #{residual_forward.5} parent=0 // loop_pre_header
    _
  $region3: #{residual_forward.5} parent=0 // loop_header
    %s12 = sphi 0, %s16
    %p13 = scmp.ge.s32.totalorder %s12, 4
    %s22 = sphi 0, %s24
    %s25 = sphi 0, %s22
    %s26 = sphi 0, %s25
    %s42 = sphi 0, %s26
    %s46 = sphi 0, %s46
    %s48 = sphi 0, %s46
    %s49 = sphi 0, %s48
    %s63 = sphi 0, %s49
    %s67 = sphi 0, %s67
    %s69 = sphi 0, %s67
    %s70 = sphi 0, %s69
    %s84 = sphi 0, %s70
    %s90 = sphi 0, %s92
    %s93 = sphi 0, %s90
    %s94 = sphi 0, %s93
    %s110 = sphi 0, %s94
    %s114 = sphi 0, %s114
    %s116 = sphi 0, %s114
    %s117 = sphi 0, %s116
    %s131 = sphi 0, %s117
    %s135 = sphi 0, %s135
    %s137 = sphi 0, %s135
    %s138 = sphi 0, %s137
    %s152 = sphi 0, %s138
    %s158 = sphi 0, %s160
    %s161 = sphi 0, %s158
    %s162 = sphi 0, %s161
    %s178 = sphi 0, %s162
  $region4: #{residual_forward.5} parent=0 // loop_header_branch
    %15 = sbr.rel (%p13) target = $region8
  $region5: #{residual_forward.5} parent=0 // loop_body
    %s17 = ssub.s32 %s12, 1
    %s18 = ssub.s32 %s12, 2
    %s19 = sadd.s32 %s12, 1
    %s20 = ssub.s32 %s12, %s19
    %p21 = scmp.eq.s32.totalorder %s20, 0
    %s23 = sadd.s32 %s22, 1
    %s24 = scalar_select %p21, %s22, %s23
    %p27 = pneg %p21
    %p28 = scmp.eq.s32.totalorder %s12, 1
    %p29 = por %p27, %p28
    %p30 = scmp.ne.s32.totalorder %s22, %s25
    %p31 = scmp.eq.s32.totalorder %s12, 0
    %p32 = por %p30, %p31
    %p33 = scmp.ne.s32.totalorder %s22, %s25
    %p34 = scmp.eq.s32.totalorder %s17, 1
    %p35 = por %p33, %p34
    %p36 = scmp.ne.s32.totalorder %s25, %s26
    %p37 = scmp.eq.s32.totalorder %s17, 0
    %p38 = por %p36, %p37
    %p39 = scmp.ne.s32.totalorder %s25, %s26
    %p40 = scmp.eq.s32.totalorder %s18, 1
    %p41 = por %p39, %p40
    %p43 = scmp.ne.s32.totalorder %s26, %s42
    %p44 = scmp.eq.s32.totalorder %s18, 0
    %p45 = por %p43, %p44
    %s47 = sadd.s32 %s46, 1
    %p50 = scmp.eq.s32.totalorder %s12, 1
    %p51 = scmp.ne.s32.totalorder %s46, %s48
    %p52 = scmp.eq.s32.totalorder %s12, 0
    %p53 = por %p51, %p52
    %p54 = scmp.ne.s32.totalorder %s46, %s48
    %p55 = scmp.eq.s32.totalorder %s17, 1
    %p56 = por %p54, %p55
    %p57 = scmp.ne.s32.totalorder %s48, %s49
    %p58 = scmp.eq.s32.totalorder %s17, 0
    %p59 = por %p57, %p58
    %p60 = scmp.ne.s32.totalorder %s48, %s49
    %p61 = scmp.eq.s32.totalorder %s18, 1
    %p62 = por %p60, %p61
    %p64 = scmp.ne.s32.totalorder %s49, %s63
    %p65 = scmp.eq.s32.totalorder %s18, 0
    %p66 = por %p64, %p65
    %s68 = sadd.s32 %s67, 1
    %p71 = scmp.eq.s32.totalorder %s12, 1
    %p72 = scmp.ne.s32.totalorder %s67, %s69
    %p73 = scmp.eq.s32.totalorder %s12, 0
    %p74 = por %p72, %p73
    %p75 = scmp.ne.s32.totalorder %s67, %s69
    %p76 = scmp.eq.s32.totalorder %s17, 1
    %p77 = por %p75, %p76
    %p78 = scmp.ne.s32.totalorder %s69, %s70
    %p79 = scmp.eq.s32.totalorder %s17, 0
    %p80 = por %p78, %p79
    %p81 = scmp.ne.s32.totalorder %s69, %s70
    %p82 = scmp.eq.s32.totalorder %s18, 1
    %p83 = por %p81, %p82
    %p85 = scmp.ne.s32.totalorder %s70, %s84
    %p86 = scmp.eq.s32.totalorder %s18, 0
    %p87 = por %p85, %p86
    %s88 = ssub.s32 %s12, %s19
    %p89 = scmp.eq.s32.totalorder %s88, 0
    %s91 = sadd.s32 %s90, 1
    %s92 = scalar_select %p89, %s90, %s91
    %p95 = pneg %p89
    %p96 = scmp.eq.s32.totalorder %s12, 1
    %p97 = por %p95, %p96
    %p98 = scmp.ne.s32.totalorder %s90, %s93
    %p99 = scmp.eq.s32.totalorder %s12, 0
    %p100 = por %p98, %p99
    %p101 = scmp.ne.s32.totalorder %s90, %s93
    %p102 = scmp.eq.s32.totalorder %s17, 1
    %p103 = por %p101, %p102
    %p104 = scmp.ne.s32.totalorder %s93, %s94
    %p105 = scmp.eq.s32.totalorder %s17, 0
    %p106 = por %p104, %p105
    %p107 = scmp.ne.s32.totalorder %s93, %s94
    %p108 = scmp.eq.s32.totalorder %s18, 1
    %p109 = por %p107, %p108
    %p111 = scmp.ne.s32.totalorder %s94, %s110
    %p112 = scmp.eq.s32.totalorder %s18, 0
    %p113 = por %p111, %p112
    %s115 = sadd.s32 %s114, 1
    %p118 = scmp.eq.s32.totalorder %s12, 1
    %p119 = scmp.ne.s32.totalorder %s114, %s116
    %p120 = scmp.eq.s32.totalorder %s12, 0
    %p121 = por %p119, %p120
    %p122 = scmp.ne.s32.totalorder %s114, %s116
    %p123 = scmp.eq.s32.totalorder %s17, 1
    %p124 = por %p122, %p123
    %p125 = scmp.ne.s32.totalorder %s116, %s117
    %p126 = scmp.eq.s32.totalorder %s17, 0
    %p127 = por %p125, %p126
    %p128 = scmp.ne.s32.totalorder %s116, %s117
    %p129 = scmp.eq.s32.totalorder %s18, 1
    %p130 = por %p128, %p129
    %p132 = scmp.ne.s32.totalorder %s117, %s131
    %p133 = scmp.eq.s32.totalorder %s18, 0
    %p134 = por %p132, %p133
    %s136 = sadd.s32 %s135, 1
    %p139 = scmp.eq.s32.totalorder %s12, 1
    %p140 = scmp.ne.s32.totalorder %s135, %s137
    %p141 = scmp.eq.s32.totalorder %s12, 0
    %p142 = por %p140, %p141
    %p143 = scmp.ne.s32.totalorder %s135, %s137
    %p144 = scmp.eq.s32.totalorder %s17, 1
    %p145 = por %p143, %p144
    %p146 = scmp.ne.s32.totalorder %s137, %s138
    %p147 = scmp.eq.s32.totalorder %s17, 0
    %p148 = por %p146, %p147
    %p149 = scmp.ne.s32.totalorder %s137, %s138
    %p150 = scmp.eq.s32.totalorder %s18, 1
    %p151 = por %p149, %p150
    %p153 = scmp.ne.s32.totalorder %s138, %s152
    %p154 = scmp.eq.s32.totalorder %s18, 0
    %p155 = por %p153, %p154
    %s156 = ssub.s32 %s12, %s19
    %p157 = scmp.eq.s32.totalorder %s156, 0
    %s159 = sadd.s32 %s158, 1
    %s160 = scalar_select %p157, %s158, %s159
    %p163 = pneg %p157
    %p164 = scmp.eq.s32.totalorder %s12, 1
    %p165 = por %p163, %p164
    %p166 = scmp.ne.s32.totalorder %s158, %s161
    %p167 = scmp.eq.s32.totalorder %s12, 0
    %p168 = por %p166, %p167
    %p169 = scmp.ne.s32.totalorder %s158, %s161
    %p170 = scmp.eq.s32.totalorder %s17, 1
    %p171 = por %p169, %p170
    %p172 = scmp.ne.s32.totalorder %s161, %s162
    %p173 = scmp.eq.s32.totalorder %s17, 0
    %p174 = por %p172, %p173
    %p175 = scmp.ne.s32.totalorder %s161, %s162
    %p176 = scmp.eq.s32.totalorder %s18, 1
    %p177 = por %p175, %p176
    %p179 = scmp.ne.s32.totalorder %s162, %s178
    %p180 = scmp.eq.s32.totalorder %s18, 0
    %p181 = por %p179, %p180
    %p182 = scmp.le.s32.totalorder 1, %s12
    %p183 = scmp.lt.s32.totalorder %s12, 3
    %p184 = pnand %p182, %p183
    %p185 = pneg %p184
    // Predicated region
    $region9: #{residual_forward.5} parent=5 // pred_check
      _
    $region10: #{residual_forward.5} parent=5 // pred_check_branch
      %187 = sbr.rel (%p184) target = $region12
    $region11: #{residual_forward.5} parent=5 // pred_region
      %s188 = ssub.s32 %s12, 1
      // Predicated region
      $region13: #{residual_forward.5} parent=11 // pred_check
        %p189 = pneg %p59
      $region14: #{residual_forward.5} parent=11 // pred_check_branch
        %191 = sbr.rel (%p189) target = $region16
      $region15: #{residual_forward.5} parent=11 // pred_region
        _
      $region16: #{residual_forward.5} parent=11 // pred_fallthru
        _
      // Predicated region
      $region17: #{residual_forward.5} parent=11 // pred_check
        %p192 = pneg %p80
      $region18: #{residual_forward.5} parent=11 // pred_check_branch
        %194 = sbr.rel (%p192) target = $region20
      $region19: #{residual_forward.5} parent=11 // pred_region
        _
      $region20: #{residual_forward.5} parent=11 // pred_fallthru
        _
      // Predicated region
      $region21: #{residual_forward.5} parent=11 // pred_check
        %p195 = pneg %p127
      $region22: #{residual_forward.5} parent=11 // pred_check_branch
        %197 = sbr.rel (%p195) target = $region24
      $region23: #{residual_forward.5} parent=11 // pred_region
        _
      $region24: #{residual_forward.5} parent=11 // pred_fallthru
        _
      // Predicated region
      $region25: #{residual_forward.5} parent=11 // pred_check
        %p198 = pneg %p148
      $region26: #{residual_forward.5} parent=11 // pred_check_branch
        %200 = sbr.rel (%p198) target = $region28
      $region27: #{residual_forward.5} parent=11 // pred_region
        _
      $region28: #{residual_forward.5} parent=11 // pred_fallthru
        _
    $region12: #{residual_forward.5} parent=5 // pred_fallthru
      _
    %p201 = scmp.lt.s32.totalorder %s12, 2
    // Predicated region
    $region29: #{residual_forward.5} parent=5 // pred_check
      %p202 = pneg %p201
    $region30: #{residual_forward.5} parent=5 // pred_check_branch
      %204 = sbr.rel (%p202) target = $region32
    $region31: #{residual_forward.5} parent=5 // pred_region
      // Predicated region
      $region33: #{residual_forward.5} parent=31 // pred_check
        %p205 = pneg %p32
      $region34: #{residual_forward.5} parent=31 // pred_check_branch
        %207 = sbr.rel (%p205) target = $region36
      $region35: #{residual_forward.5} parent=31 // pred_region
        %p208 = scmp.lt.s32.totalorder %s12, 1
        %s209 = scalar_select %p208, %s12, 1
        %s210 = smul.addr %s209, 2
        %s211 = smul.addr %s210, 4
        %s212 = scalar_lea.vmem %s0, %s211
      $region36: #{residual_forward.5} parent=31 // pred_fallthru
        _
      // Predicated region
      $region37: #{residual_forward.5} parent=31 // pred_check
        %p213 = pneg %p100
      $region38: #{residual_forward.5} parent=31 // pred_check_branch
        %215 = sbr.rel (%p213) target = $region40
      $region39: #{residual_forward.5} parent=31 // pred_region
        %p216 = scmp.lt.s32.totalorder %s12, 1
        %s217 = scalar_select %p216, %s12, 1
        %s218 = smul.addr %s217, 2
        %s219 = smul.addr %s218, 2
        %s220 = scalar_lea.vmem %s3, %s219
      $region40: #{residual_forward.5} parent=31 // pred_fallthru
        _
    $region32: #{residual_forward.5} parent=5 // pred_fallthru
      _
    %p221 = scmp.le.s32.totalorder 1, %s12
    %p222 = scmp.lt.s32.totalorder %s12, 3
    %p223 = pnand %p221, %p222
    %p224 = pneg %p223
    // Predicated region
    $region41: #{residual_forward.5} parent=5 // pred_check
      _
    $region42: #{residual_forward.5} parent=5 // pred_check_branch
      %226 = sbr.rel (%p223) target = $region44
    $region43: #{residual_forward.5} parent=5 // pred_region
      %s227 = ssub.s32 %s12, 1
      %p228 = scmp.lt.s32.totalorder %s17, 1
      %s229 = scalar_select %p228, %s17, 1
      %s230 = smul.addr %s229, 2
      %s231 = smul.addr %s230, 4
      %s232 = scalar_lea.vmem %s0, %s231
      %p233 = pneg %p38
      %p234 = pneg %p35
      %p235 = pneg %p59
      %p236 = pneg %p56
      %p237 = pneg %p80
      %p238 = pneg %p77
      %p239 = scmp.lt.s32.totalorder %s17, 1
      %s240 = scalar_select %p239, %s17, 1
      %s241 = smul.addr %s240, 2
      %s242 = smul.addr %s241, 2
      %s243 = scalar_lea.vmem %s3, %s242
      %p244 = pneg %p106
      %p245 = pneg %p103
      %p246 = pneg %p127
      %p247 = pneg %p124
      %p248 = pneg %p148
      %p249 = pneg %p145
      %p250 = pneg %p174
      %p251 = pneg %p171
      %p252 = scmp.lt.s32.totalorder %s17, 1
      %s253 = scalar_select %p252, %s17, 1
      %s254 = smul.addr %s253, 2
      %s255 = smul.addr %s254, 8
      %s256 = scalar_lea.vmem %s6, %s255
      %p257 = scmp.lt.s32.totalorder %s17, 1
      %s258 = scalar_select %p257, %s17, 1
      %s259 = smul.addr %s258, 2
      %s260 = smul.addr %s259, 4
      %s261 = scalar_lea.vmem %s0, %s260
      %p262 = scmp.lt.s32.totalorder %s17, 1
      %s263 = scalar_select %p262, %s17, 1
      %s264 = smul.addr %s263, 2
      %s265 = smul.addr %s264, 2
      %s266 = scalar_lea.vmem %s3, %s265
      %p267 = scmp.lt.s32.totalorder %s17, 1
      %s268 = scalar_select %p267, %s17, 1
      %s269 = smul.addr %s268, 2
      %s270 = smul.addr %s269, 8
      %s271 = scalar_lea.vmem %s6, %s270
      %v273 = vld [vmem:[%s4] sm:$0xf]
      %v274 = vld [vmem:[%s266] sm:$0xf]
      %v275 = vld [vmem:[%s5] sm:$0xff]
      %277 = vset.pattern.permute.xlu0 0
      %278 = vperm.xlu0 %277, %v275
      %v279 = vpop.permute.xlu0 %278
      %282 = vst [vmem:[#allocation1] ss:$4 sm:$0xff] %v274
      %v283 = vld.sshfl [vmem:[#allocation1] sm:$0xff pattern:$0x73625140]
      %v284 = vld.sshfl [vmem:[#allocation1 + $0x8] sm:$0xff pattern:$0x73625140]
      %vm285 = vcmask 31744
      %v287 = vsel %vm285, %v273, 0
      %vm289 = vcmask 1041408
      %v290 = vsel %vm289, %v283, 0
      %v292 = vsel %vm289, %v284, 0
      %294 = vmatpush.bf16.msra.mxu0 0
      %295 = vmatpush.bf16.msra.mxu0 0
      %296 = vmatpush.bf16.msra.mxu0 0
      %297 = vmatpush.bf16.msra.mxu0 0
      %298 = vmatpush.bf16.msra.mxu0 0
      %299 = vmatpush.bf16.msra.mxu0 0
      %300 = vmatpush.bf16.msra.mxu0 0
      %301 = vmatpush.bf16.msra.mxu0 %v290
      %302 = vmatmul.bf16.gmra.mxu0 %v287
      %v303 = vpop.f32.mrf.mxu0
      %v304 = vadd.f32 %v279, %v303
      %v305 = vpop.f32.mrf.mxu0
      %306 = vdwg.mxu0
      %307 = vmatpush.bf16.msra.mxu0 0
      %308 = vmatpush.bf16.msra.mxu0 0
      %309 = vmatpush.bf16.msra.mxu0 0
      %310 = vmatpush.bf16.msra.mxu0 0
      %311 = vmatpush.bf16.msra.mxu0 0
      %312 = vmatpush.bf16.msra.mxu0 0
      %313 = vmatpush.bf16.msra.mxu0 0
      %314 = vmatpush.bf16.msra.mxu0 %v292
      %315 = vmatmul.bf16.gmra.mxu0 %v287
      %v316 = vpop.f32.mrf.mxu0
      %v317 = vadd.f32 %v279, %v316
      %v318 = vpop.f32.mrf.mxu0
      %319 = vdwg.mxu0
      %v320 = vld [vmem:[%s261] sm:$0xff]
      %v321 = vunpack.c.l.bf16 %v320
      %v322 = vunpack.c.h.bf16 %v320
      %v323 = vld [vmem:[%s1] sm:$0xff]
      %325 = vset.pattern.permute.xlu0 0
      %326 = vperm.xlu0 %325, %v323
      %v327 = vpop.permute.xlu0 %326
      %v329 = vmul.f32 %v321, %v327
      %v330 = vmul.f32 %v322, %v327
      %v331 = vld [vmem:[%s2] sm:$0xff]
      %333 = vset.pattern.permute.xlu0 0
      %334 = vperm.xlu0 %333, %v331
      %v335 = vpop.permute.xlu0 %334
      %v337 = vadd.f32 %v329, %v335
      %v338 = vadd.f32 %v330, %v335
      %v339 = vadd.f32 %v337, %v304
      %v340 = vadd.f32 %v338, %v317
      %v341 = vmax.f32 %v339, 0.0
      %v342 = vmax.f32 %v340, 0.0
      %343 = vst [vmem:[%s271] sm:$0xff] %v341
      %344 = vst [vmem:[%s271 + $0x8] sm:$0xff] %v342
      %p345 = scmp.lt.s32.totalorder %s17, 1
      %s346 = scalar_select %p345, %s17, 1
      %s347 = smul.addr %s346, 2
      %s348 = smul.addr %s347, 8
      %s349 = scalar_lea.vmem %s6, %s348
      // Predicated region
      $region45: #{residual_forward.5} parent=43 // pred_check
        %p350 = pneg %p171
      $region46: #{residual_forward.5} parent=43 // pred_check_branch
        %352 = sbr.rel (%p350) target = $region48
      $region47: #{residual_forward.5} parent=43 // pred_region
        _
      $region48: #{residual_forward.5} parent=43 // pred_fallthru
        _
    $region44: #{residual_forward.5} parent=5 // pred_fallthru
      _
    %p353 = scmp.le.s32.totalorder 2, %s12
    // Predicated region
    $region49: #{residual_forward.5} parent=5 // pred_check
      %p354 = pneg %p353
    $region50: #{residual_forward.5} parent=5 // pred_check_branch
      %356 = sbr.rel (%p354) target = $region52
    $region51: #{residual_forward.5} parent=5 // pred_region
      %s357 = ssub.s32 %s12, 2
      // Predicated region
      $region53: #{residual_forward.5} parent=51 // pred_check
        %p358 = pneg %p177
      $region54: #{residual_forward.5} parent=51 // pred_check_branch
        %360 = sbr.rel (%p358) target = $region56
      $region55: #{residual_forward.5} parent=51 // pred_region
        %p361 = scmp.lt.s32.totalorder %s18, 1
        %s362 = scalar_select %p361, %s18, 1
        %s363 = smul.addr %s362, 2
        %s364 = smul.addr %s363, 8
        %s365 = scalar_lea.vmem %s6, %s364
      $region56: #{residual_forward.5} parent=51 // pred_fallthru
        _
    $region52: #{residual_forward.5} parent=5 // pred_fallthru
      _
  $region6: #{residual_forward.5} parent=0 // loop_footer
    %s16 = sadd.s32 1, %s12
  $region7: #{residual_forward.5} parent=0 // loop_footer_branch
    %11 = sbr.rel target = $region3
  $region8: #{residual_forward.5} parent=0 // loop_exit
    _

// kernel: residual_forward.3
$region0: #{residual_forward.3}
  #allocation0 [shape = 'u32[]', space=smem, size = 0x4, offset = 0x4, fixed_abs, tag = 'smem constant byte address 0x4 - core index']
  #allocation1 [shape = 'u32[72,128]{1,0:T(1,128)}', space=vmem, size = 0x9000, scoped, tag = 'internal scratch']
  #allocation2 [shape = 'f32[8,1]{1,0:T(8,128)}', space=vmem, size = 0x1000, scoped, tag = 'scratch operand']
  #allocation3 [shape = 'f32[8,1]{1,0:T(8,128)}', space=vmem, size = 0x1000, scoped, tag = 'scratch operand']
  %s0 = inlined_call_operand.vmem [shape: bf16[2,36,256], index: 0, kind: input, shape index: {}]
  %s1 = inlined_call_operand.vmem [shape: bf16[8,36], index: 1, kind: input, shape index: {}]
  %s2 = inlined_call_operand.vmem [shape: f32[8,1], index: 2, kind: input, shape index: {}]
  %s3 = inlined_call_operand.vmem [shape: bf16[2,8,256], index: 3, kind: output, shape index: {0}]
  %s4 = inlined_call_operand.vmem [shape: f32[8,1], index: 4, kind: output, shape index: {1}]
  %s5 = inlined_call_operand.vmem [shape: f32[8,1], index: 5, kind: output, shape index: {2}]
  %6 = xla_tuple %s3, %s4, %s5
  %s7 = sld [smem:[#allocation0]]
  $region69: #{residual_forward.3} parent=0
    _
  %s9 = ssub.s32 1, %s7
  %s10 = scalar_select 0, %s9, %s7
  loop: start=0, step=1, limit=4
  $region2: #{residual_forward.3} parent=0 // loop_pre_header
    _
  $region3: #{residual_forward.3} parent=0 // loop_header
    %s12 = sphi 0, %s16
    %p13 = scmp.ge.s32.totalorder %s12, 4
    %s22 = sphi 0, %s24
    %s25 = sphi 0, %s22
    %s26 = sphi 0, %s25
    %s42 = sphi 0, %s26
    %s46 = sphi 0, %s46
    %s48 = sphi 0, %s46
    %s49 = sphi 0, %s48
    %s63 = sphi 0, %s49
    %s67 = sphi 0, %s67
    %s69 = sphi 0, %s67
    %s70 = sphi 0, %s69
    %s84 = sphi 0, %s70
    %s90 = sphi 0, %s92
    %s93 = sphi 0, %s90
    %s94 = sphi 0, %s93
    %s110 = sphi 0, %s94
    %s114 = sphi 0, %s114
    %s116 = sphi 0, %s114
    %s117 = sphi 0, %s116
    %s131 = sphi 0, %s117
    %s135 = sphi 0, %s135
    %s137 = sphi 0, %s135
    %s138 = sphi 0, %s137
    %s152 = sphi 0, %s138
  $region4: #{residual_forward.3} parent=0 // loop_header_branch
    %15 = sbr.rel (%p13) target = $region8
  $region5: #{residual_forward.3} parent=0 // loop_body
    %s17 = ssub.s32 %s12, 1
    %s18 = ssub.s32 %s12, 2
    %s19 = sadd.s32 %s12, 1
    %s20 = ssub.s32 %s12, %s19
    %p21 = scmp.eq.s32.totalorder %s20, 0
    %s23 = sadd.s32 %s22, 1
    %s24 = scalar_select %p21, %s22, %s23
    %p27 = pneg %p21
    %p28 = scmp.eq.s32.totalorder %s12, 1
    %p29 = por %p27, %p28
    %p30 = scmp.ne.s32.totalorder %s22, %s25
    %p31 = scmp.eq.s32.totalorder %s12, 0
    %p32 = por %p30, %p31
    %p33 = scmp.ne.s32.totalorder %s22, %s25
    %p34 = scmp.eq.s32.totalorder %s17, 1
    %p35 = por %p33, %p34
    %p36 = scmp.ne.s32.totalorder %s25, %s26
    %p37 = scmp.eq.s32.totalorder %s17, 0
    %p38 = por %p36, %p37
    %p39 = scmp.ne.s32.totalorder %s25, %s26
    %p40 = scmp.eq.s32.totalorder %s18, 1
    %p41 = por %p39, %p40
    %p43 = scmp.ne.s32.totalorder %s26, %s42
    %p44 = scmp.eq.s32.totalorder %s18, 0
    %p45 = por %p43, %p44
    %s47 = sadd.s32 %s46, 1
    %p50 = scmp.eq.s32.totalorder %s12, 1
    %p51 = scmp.ne.s32.totalorder %s46, %s48
    %p52 = scmp.eq.s32.totalorder %s12, 0
    %p53 = por %p51, %p52
    %p54 = scmp.ne.s32.totalorder %s46, %s48
    %p55 = scmp.eq.s32.totalorder %s17, 1
    %p56 = por %p54, %p55
    %p57 = scmp.ne.s32.totalorder %s48, %s49
    %p58 = scmp.eq.s32.totalorder %s17, 0
    %p59 = por %p57, %p58
    %p60 = scmp.ne.s32.totalorder %s48, %s49
    %p61 = scmp.eq.s32.totalorder %s18, 1
    %p62 = por %p60, %p61
    %p64 = scmp.ne.s32.totalorder %s49, %s63
    %p65 = scmp.eq.s32.totalorder %s18, 0
    %p66 = por %p64, %p65
    %s68 = sadd.s32 %s67, 1
    %p71 = scmp.eq.s32.totalorder %s12, 1
    %p72 = scmp.ne.s32.totalorder %s67, %s69
    %p73 = scmp.eq.s32.totalorder %s12, 0
    %p74 = por %p72, %p73
    %p75 = scmp.ne.s32.totalorder %s67, %s69
    %p76 = scmp.eq.s32.totalorder %s17, 1
    %p77 = por %p75, %p76
    %p78 = scmp.ne.s32.totalorder %s69, %s70
    %p79 = scmp.eq.s32.totalorder %s17, 0
    %p80 = por %p78, %p79
    %p81 = scmp.ne.s32.totalorder %s69, %s70
    %p82 = scmp.eq.s32.totalorder %s18, 1
    %p83 = por %p81, %p82
    %p85 = scmp.ne.s32.totalorder %s70, %s84
    %p86 = scmp.eq.s32.totalorder %s18, 0
    %p87 = por %p85, %p86
    %s88 = ssub.s32 %s12, %s19
    %p89 = scmp.eq.s32.totalorder %s88, 0
    %s91 = sadd.s32 %s90, 1
    %s92 = scalar_select %p89, %s90, %s91
    %p95 = pneg %p89
    %p96 = scmp.eq.s32.totalorder %s12, 1
    %p97 = por %p95, %p96
    %p98 = scmp.ne.s32.totalorder %s90, %s93
    %p99 = scmp.eq.s32.totalorder %s12, 0
    %p100 = por %p98, %p99
    %p101 = scmp.ne.s32.totalorder %s90, %s93
    %p102 = scmp.eq.s32.totalorder %s17, 1
    %p103 = por %p101, %p102
    %p104 = scmp.ne.s32.totalorder %s93, %s94
    %p105 = scmp.eq.s32.totalorder %s17, 0
    %p106 = por %p104, %p105
    %p107 = scmp.ne.s32.totalorder %s93, %s94
    %p108 = scmp.eq.s32.totalorder %s18, 1
    %p109 = por %p107, %p108
    %p111 = scmp.ne.s32.totalorder %s94, %s110
    %p112 = scmp.eq.s32.totalorder %s18, 0
    %p113 = por %p111, %p112
    %s115 = sadd.s32 %s114, 1
    %p118 = scmp.eq.s32.totalorder %s12, 1
    %p119 = scmp.ne.s32.totalorder %s114, %s116
    %p120 = scmp.eq.s32.totalorder %s12, 0
    %p121 = por %p119, %p120
    %p122 = scmp.ne.s32.totalorder %s114, %s116
    %p123 = scmp.eq.s32.totalorder %s17, 1
    %p124 = por %p122, %p123
    %p125 = scmp.ne.s32.totalorder %s116, %s117
    %p126 = scmp.eq.s32.totalorder %s17, 0
    %p127 = por %p125, %p126
    %p128 = scmp.ne.s32.totalorder %s116, %s117
    %p129 = scmp.eq.s32.totalorder %s18, 1
    %p130 = por %p128, %p129
    %p132 = scmp.ne.s32.totalorder %s117, %s131
    %p133 = scmp.eq.s32.totalorder %s18, 0
    %p134 = por %p132, %p133
    %s136 = sadd.s32 %s135, 1
    %p139 = scmp.eq.s32.totalorder %s12, 1
    %p140 = scmp.ne.s32.totalorder %s135, %s137
    %p141 = scmp.eq.s32.totalorder %s12, 0
    %p142 = por %p140, %p141
    %p143 = scmp.ne.s32.totalorder %s135, %s137
    %p144 = scmp.eq.s32.totalorder %s17, 1
    %p145 = por %p143, %p144
    %p146 = scmp.ne.s32.totalorder %s137, %s138
    %p147 = scmp.eq.s32.totalorder %s17, 0
    %p148 = por %p146, %p147
    %p149 = scmp.ne.s32.totalorder %s137, %s138
    %p150 = scmp.eq.s32.totalorder %s18, 1
    %p151 = por %p149, %p150
    %p153 = scmp.ne.s32.totalorder %s138, %s152
    %p154 = scmp.eq.s32.totalorder %s18, 0
    %p155 = por %p153, %p154
    %p156 = scmp.le.s32.totalorder 1, %s12
    %p157 = scmp.lt.s32.totalorder %s12, 3
    %p158 = pnand %p156, %p157
    %p159 = pneg %p158
    // Predicated region
    $region9: #{residual_forward.3} parent=5 // pred_check
      _
    $region10: #{residual_forward.3} parent=5 // pred_check_branch
      %161 = sbr.rel (%p158) target = $region12
    $region11: #{residual_forward.3} parent=5 // pred_region
      %s162 = ssub.s32 %s12, 1
      // Predicated region
      $region13: #{residual_forward.3} parent=11 // pred_check
        %p163 = pneg %p59
      $region14: #{residual_forward.3} parent=11 // pred_check_branch
        %165 = sbr.rel (%p163) target = $region16
      $region15: #{residual_forward.3} parent=11 // pred_region
        _
      $region16: #{residual_forward.3} parent=11 // pred_fallthru
        _
      // Predicated region
      $region17: #{residual_forward.3} parent=11 // pred_check
        %p166 = pneg %p80
      $region18: #{residual_forward.3} parent=11 // pred_check_branch
        %168 = sbr.rel (%p166) target = $region20
      $region19: #{residual_forward.3} parent=11 // pred_region
        _
      $region20: #{residual_forward.3} parent=11 // pred_fallthru
        _
    $region12: #{residual_forward.3} parent=5 // pred_fallthru
      _
    %p169 = scmp.lt.s32.totalorder %s12, 2
    // Predicated region
    $region21: #{residual_forward.3} parent=5 // pred_check
      %p170 = pneg %p169
    $region22: #{residual_forward.3} parent=5 // pred_check_branch
      %172 = sbr.rel (%p170) target = $region24
    $region23: #{residual_forward.3} parent=5 // pred_region
      // Predicated region
      $region25: #{residual_forward.3} parent=23 // pred_check
        %p173 = pneg %p32
      $region26: #{residual_forward.3} parent=23 // pred_check_branch
        %175 = sbr.rel (%p173) target = $region28
      $region27: #{residual_forward.3} parent=23 // pred_region
        %p176 = scmp.lt.s32.totalorder %s12, 1
        %s177 = scalar_select %p176, %s12, 1
        %s178 = smul.addr %s177, 10
        %s179 = smul.addr %s178, 4
        %s180 = scalar_lea.vmem %s0, %s179
      $region28: #{residual_forward.3} parent=23 // pred_fallthru
        _
    $region24: #{residual_forward.3} parent=5 // pred_fallthru
      _
    %p181 = scmp.le.s32.totalorder 1, %s12
    %p182 = scmp.lt.s32.totalorder %s12, 3
    %p183 = pnand %p181, %p182
    %p184 = pneg %p183
    // Predicated region
    $region29: #{residual_forward.3} parent=5 // pred_check
      _
    $region30: #{residual_forward.3} parent=5 // pred_check_branch
      %186 = sbr.rel (%p183) target = $region32
    $region31: #{residual_forward.3} parent=5 // pred_region
      %s187 = ssub.s32 %s12, 1
      %p188 = scmp.lt.s32.totalorder %s17, 1
      %s189 = scalar_select %p188, %s17, 1
      %s190 = smul.addr %s189, 10
      %s191 = smul.addr %s190, 4
      %s192 = scalar_lea.vmem %s0, %s191
      %p193 = pneg %p38
      %p194 = pneg %p35
      %p195 = pneg %p59
      %p196 = pneg %p56
      %p197 = pneg %p80
      %p198 = pneg %p77
      %p199 = pneg %p106
      %p200 = pneg %p103
      %p201 = scmp.lt.s32.totalorder %s17, 1
      %s202 = scalar_select %p201, %s17, 1
      %s203 = smul.addr %s202, 2
      %s204 = smul.addr %s203, 4
      %s205 = scalar_lea.vmem %s3, %s204
      %p206 = pneg %p127
      %p207 = pneg %p124
      %p208 = pneg %p148
      %p209 = pneg %p145
      %p210 = scmp.lt.s32.totalorder %s17, 1
      %s211 = scalar_select %p210, %s17, 1
      %s212 = smul.addr %s211, 10
      %s213 = smul.addr %s212, 4
      %s214 = scalar_lea.vmem %s0, %s213
      %p215 = scmp.lt.s32.totalorder %s17, 1
      %s216 = scalar_select %p215, %s17, 1
      %s217 = smul.addr %s216, 2
      %s218 = smul.addr %s217, 4
      %s219 = scalar_lea.vmem %s3, %s218
      %v221 = vld [vmem:[%s1] sm:$0xf]
      %v222 = vld [vmem:[%s214] sm:$0xff]
      %v223 = vld [vmem:[%s214 + $0x8] sm:$0xff]
      %v224 = vld [vmem:[%s214 + $0x10] sm:$0xff]
      %v225 = vld [vmem:[%s214 + $0x18] sm:$0xff]
      %v226 = vld [vmem:[%s214 + $0x20] sm:$0x33]
      %v227 = vld [vmem:[%s2] sm:$0xff]
      %229 = vset.pattern.permute.xlu0 0
      %230 = vperm.xlu0 %229, %v227
      %v231 = vpop.permute.xlu0 %230
      %v238 = vunpack.c.l.b16 %v222
      %v239 = vunpack.c.h.b16 %v222
      %v240 = vunpack.c.l.b16 %v223
      %v241 = vunpack.c.h.b16 %v223
      %v242 = vunpack.c.l.b16 %v224
      %v243 = vunpack.c.h.b16 %v224
      %v244 = vunpack.c.l.b16 %v225
      %v245 = vunpack.c.h.b16 %v225
      %v246 = vunpack.c.l.b16 %v226
      %v247 = vunpack.c.h.b16 %v226
      %v248 = vpack.c.b16 %v240, %v238
      %v249 = vpack.c.b16 %v241, %v239
      %v250 = vpack.c.b16 %v244, %v242
      %v251 = vpack.c.b16 %v245, %v243
      %v252 = vpack.c.b16 %v246, %v246
      %v253 = vpack.c.b16 %v247, %v247
      %vm258 = vcmask 293888
      %v260 = vsel %vm258, %v221, 0
      %vm262 = vcmask 1041408
      %v264 = vsel %vm262, %v252, 0
      %v267 = vsel %vm262, %v253, 0
      %269 = vmatpush.bf16.msra.mxu0 0
      %270 = vmatpush.bf16.msra.mxu0 0
      %271 = vmatpush.bf16.msra.mxu0 0
      %272 = vmatpush.bf16.msra.mxu0 0
      %273 = vmatpush.bf16.msra.mxu0 0
      %274 = vmatpush.bf16.msra.mxu0 %v264
      %275 = vmatpush.bf16.msra.mxu0 %v250
      %276 = vmatpush.bf16.msra.mxu0 %v248
      %277 = vmatmul.bf16.gmra.mxu0 %v260
      %v278 = vpop.f32.mrf.mxu0
      %v279 = vadd.f32 %v231, %v278
      %v280 = vpop.f32.mrf.mxu0
      %281 = vdwg.mxu0
      %282 = vmatpush.bf16.msra.mxu0 0
      %283 = vmatpush.bf16.msra.mxu0 0
      %284 = vmatpush.bf16.msra.mxu0 0
      %285 = vmatpush.bf16.msra.mxu0 0
      %286 = vmatpush.bf16.msra.mxu0 0
      %287 = vmatpush.bf16.msra.mxu0 %v267
      %288 = vmatpush.bf16.msra.mxu0 %v251
      %289 = vmatpush.bf16.msra.mxu0 %v249
      %290 = vmatmul.bf16.gmra.mxu0 %v260
      %v291 = vpop.f32.mrf.mxu0
      %v292 = vadd.f32 %v231, %v291
      %v293 = vpop.f32.mrf.mxu0
      %294 = vdwg.mxu0
      %v295 = vpack.c.bf16 %v292, %v279
      %296 = vst [vmem:[%s219] sm:$0xff] %v295
      %p297 = scmp.eq.s32.totalorder %s17, 0
      // Predicated region
      $region33: #{residual_forward.3} parent=31 // pred_check
        %p298 = pneg %p297
      $region34: #{residual_forward.3} parent=31 // pred_check_branch
        %300 = sbr.rel (%p298) target = $region36
      $region35: #{residual_forward.3} parent=31 // pred_region
        %vm301 = vcmask 7168
        %302 = vst.msk [vmem:[#allocation2] sm:$0xff] %vm301, 0.0
        %303 = vst.msk [vmem:[#allocation3] sm:$0xff] %vm301, 0.0
      $region36: #{residual_forward.3} parent=31 // pred_fallthru
        _
      %v304 = vld [vmem:[#allocation2] sm:$0xff]
      %v305 = vadd.f32 %v279, %v292
      %306 = vadd.xlane.f32.xlu0 %v305
      %v307 = vpop.xlane.xlu0 %306
      %v308 = vadd.f32 %v304, %v307
      %vm309 = vcmask 7168
      %310 = vst.msk [vmem:[#allocation2] sm:$0xff] %vm309, %v308
      %v311 = vld [vmem:[#allocation3] sm:$0xff]
      %v312 = vmul.f32 %v279, %v279
      %v313 = vmul.f32 %v292, %v292
      %v314 = vadd.f32 %v312, %v313
      %315 = vadd.xlane.f32.xlu0 %v314
      %v316 = vpop.xlane.xlu0 %315
      %v317 = vadd.f32 %v311, %v316
      %318 = vst.msk [vmem:[#allocation3] sm:$0xff] %vm309, %v317
      %p319 = scmp.eq.s32.totalorder %s17, 1
      // Predicated region
      $region37: #{residual_forward.3} parent=31 // pred_check
        %p320 = pneg %p319
      $region38: #{residual_forward.3} parent=31 // pred_check_branch
        %322 = sbr.rel (%p320) target = $region40
      $region39: #{residual_forward.3} parent=31 // pred_region
        %v323 = vld [vmem:[#allocation2] sm:$0xff]
        %324 = vst.msk [vmem:[%s4] sm:$0xff] %vm309, %v323
        %v325 = vld [vmem:[#allocation3] sm:$0xff]
        %326 = vst.msk [vmem:[%s5] sm:$0xff] %vm309, %v325
      $region40: #{residual_forward.3} parent=31 // pred_fallthru
        _
      %p327 = scmp.lt.s32.totalorder %s17, 1
      %s328 = scalar_select %p327, %s17, 1
      %s329 = smul.addr %s328, 2
      %s330 = smul.addr %s329, 4
      %s331 = scalar_lea.vmem %s3, %s330
      // Predicated region
      $region41: #{residual_forward.3} parent=31 // pred_check
        %p332 = pneg %p103
      $region42: #{residual_forward.3} parent=31 // pred_check_branch
        %334 = sbr.rel (%p332) target = $region44
      $region43: #{residual_forward.3} parent=31 // pred_region
        _
      $region44: #{residual_forward.3} parent=31 // pred_fallthru
        _
      // Predicated region
      $region45: #{residual_forward.3} parent=31 // pred_check
        %p335 = pneg %p124
      $region46: #{residual_forward.3} parent=31 // pred_check_branch
        %337 = sbr.rel (%p335) target = $region48
      $region47: #{residual_forward.3} parent=31 // pred_region
        _
      $region48: #{residual_forward.3} parent=31 // pred_fallthru
        _
      // Predicated region
      $region49: #{residual_forward.3} parent=31 // pred_check
        %p338 = pneg %p145
      $region50: #{residual_forward.3} parent=31 // pred_check_branch
        %340 = sbr.rel (%p338) target = $region52
      $region51: #{residual_forward.3} parent=31 // pred_region
        _
      $region52: #{residual_forward.3} parent=31 // pred_fallthru
        _
      // Predicated region
      $region53: #{residual_forward.3} parent=31 // pred_check
        %p341 = pneg %p124
      $region54: #{residual_forward.3} parent=31 // pred_check_branch
        %343 = sbr.rel (%p341) target = $region56
      $region55: #{residual_forward.3} parent=31 // pred_region
        _
      $region56: #{residual_forward.3} parent=31 // pred_fallthru
        _
      // Predicated region
      $region57: #{residual_forward.3} parent=31 // pred_check
        %p344 = pneg %p145
      $region58: #{residual_forward.3} parent=31 // pred_check_branch
        %346 = sbr.rel (%p344) target = $region60
      $region59: #{residual_forward.3} parent=31 // pred_region
        _
      $region60: #{residual_forward.3} parent=31 // pred_fallthru
        _
    $region32: #{residual_forward.3} parent=5 // pred_fallthru
      _
    %p347 = scmp.le.s32.totalorder 2, %s12
    // Predicated region
    $region61: #{residual_forward.3} parent=5 // pred_check
      %p348 = pneg %p347
    $region62: #{residual_forward.3} parent=5 // pred_check_branch
      %350 = sbr.rel (%p348) target = $region64
    $region63: #{residual_forward.3} parent=5 // pred_region
      %s351 = ssub.s32 %s12, 2
      // Predicated region
      $region65: #{residual_forward.3} parent=63 // pred_check
        %p352 = pneg %p109
      $region66: #{residual_forward.3} parent=63 // pred_check_branch
        %354 = sbr.rel (%p352) target = $region68
      $region67: #{residual_forward.3} parent=63 // pred_region
        %p355 = scmp.lt.s32.totalorder %s18, 1
        %s356 = scalar_select %p355, %s18, 1
        %s357 = smul.addr %s356, 2
        %s358 = smul.addr %s357, 4
        %s359 = scalar_lea.vmem %s3, %s358
      $region68: #{residual_forward.3} parent=63 // pred_fallthru
        _
    $region64: #{residual_forward.3} parent=5 // pred_fallthru
      _
  $region6: #{residual_forward.3} parent=0 // loop_footer
    %s16 = sadd.s32 1, %s12
  $region7: #{residual_forward.3} parent=0 // loop_footer_branch
    %11 = sbr.rel target = $region3
  $region8: #{residual_forward.3} parent=0 // loop_exit
    _

// kernel: residual_forward.4
$region0: #{residual_forward.4}
  #allocation0 [shape = 'u32[]', space=smem, size = 0x4, offset = 0x4, fixed_abs, tag = 'smem constant byte address 0x4 - core index']
  #allocation1 [shape = 'u32[72,128]{1,0:T(1,128)}', space=vmem, size = 0x9000, scoped, tag = 'internal scratch']
  #allocation2 [shape = 'f32[8,1]{1,0:T(8,128)}', space=vmem, size = 0x1000, scoped, tag = 'scratch operand']
  #allocation3 [shape = 'f32[8,1]{1,0:T(8,128)}', space=vmem, size = 0x1000, scoped, tag = 'scratch operand']
  %s0 = inlined_call_operand.vmem [shape: bf16[2,8,256], index: 0, kind: input, shape index: {}]
  %s1 = inlined_call_operand.vmem [shape: f32[8,1], index: 1, kind: input, shape index: {}]
  %s2 = inlined_call_operand.vmem [shape: f32[8,1], index: 2, kind: input, shape index: {}]
  %s3 = inlined_call_operand.vmem [shape: s32[1,256], index: 3, kind: input, shape index: {}]
  %s4 = inlined_call_operand.vmem [shape: s32[1,256], index: 4, kind: input, shape index: {}]
  %s5 = inlined_call_operand.vmem [shape: f32[9,8,8], index: 5, kind: input, shape index: {}]
  %s6 = inlined_call_operand.vmem [shape: f32[8,1], index: 6, kind: input, shape index: {}]
  %s7 = inlined_call_operand.vmem [shape: bf16[2,8,256], index: 7, kind: output, shape index: {0}]
  %s8 = inlined_call_operand.vmem [shape: f32[8,1], index: 8, kind: output, shape index: {1}]
  %s9 = inlined_call_operand.vmem [shape: f32[8,1], index: 9, kind: output, shape index: {2}]
  %10 = xla_tuple %s7, %s8, %s9
  %s11 = sld [smem:[#allocation0]]
  $region85: #{residual_forward.4} parent=0
    _
  %s13 = ssub.s32 1, %s11
  %s14 = scalar_select 0, %s13, %s11
  loop: start=0, step=1, limit=4
  $region2: #{residual_forward.4} parent=0 // loop_pre_header
    _
  $region3: #{residual_forward.4} parent=0 // loop_header
    %s16 = sphi 0, %s20
    %p17 = scmp.ge.s32.totalorder %s16, 4
    %s26 = sphi 0, %s28
    %s29 = sphi 0, %s26
    %s30 = sphi 0, %s29
    %s46 = sphi 0, %s30
    %s50 = sphi 0, %s50
    %s52 = sphi 0, %s50
    %s53 = sphi 0, %s52
    %s67 = sphi 0, %s53
    %s71 = sphi 0, %s71
    %s73 = sphi 0, %s71
    %s74 = sphi 0, %s73
    %s88 = sphi 0, %s74
    %s92 = sphi 0, %s92
    %s94 = sphi 0, %s92
    %s95 = sphi 0, %s94
    %s109 = sphi 0, %s95
    %s113 = sphi 0, %s113
    %s115 = sphi 0, %s113
    %s116 = sphi 0, %s115
    %s130 = sphi 0, %s116
    %s134 = sphi 0, %s134
    %s136 = sphi 0, %s134
    %s137 = sphi 0, %s136
    %s151 = sphi 0, %s137
    %s155 = sphi 0, %s155
    %s157 = sphi 0, %s155
    %s158 = sphi 0, %s157
    %s172 = sphi 0, %s158
    %s178 = sphi 0, %s180
    %s181 = sphi 0, %s178
    %s182 = sphi 0, %s181
    %s198 = sphi 0, %s182
    %s202 = sphi 0, %s202
    %s204 = sphi 0, %s202
    %s205 = sphi 0, %s204
    %s219 = sphi 0, %s205
    %s223 = sphi 0, %s223
    %s225 = sphi 0, %s223
    %s226 = sphi 0, %s225
    %s240 = sphi 0, %s226
  $region4: #{residual_forward.4} parent=0 // loop_header_branch
    %19 = sbr.rel (%p17) target = $region8
  $region5: #{residual_forward.4} parent=0 // loop_body
    %s21 = ssub.s32 %s16, 1
    %s22 = ssub.s32 %s16, 2
    %s23 = sadd.s32 %s16, 1
    %s24 = ssub.s32 %s16, %s23
    %p25 = scmp.eq.s32.totalorder %s24, 0
    %s27 = sadd.s32 %s26, 1
    %s28 = scalar_select %p25, %s26, %s27
    %p31 = pneg %p25
    %p32 = scmp.eq.s32.totalorder %s16, 1
    %p33 = por %p31, %p32
    %p34 = scmp.ne.s32.totalorder %s26, %s29
    %p35 = scmp.eq.s32.totalorder %s16, 0
    %p36 = por %p34, %p35
    %p37 = scmp.ne.s32.totalorder %s26, %s29
    %p38 = scmp.eq.s32.totalorder %s21, 1
    %p39 = por %p37, %p38
    %p40 = scmp.ne.s32.totalorder %s29, %s30
    %p41 = scmp.eq.s32.totalorder %s21, 0
    %p42 = por %p40, %p41
    %p43 = scmp.ne.s32.totalorder %s29, %s30
    %p44 = scmp.eq.s32.totalorder %s22, 1
    %p45 = por %p43, %p44
    %p47 = scmp.ne.s32.totalorder %s30, %s46
    %p48 = scmp.eq.s32.totalorder %s22, 0
    %p49 = por %p47, %p48
    %s51 = sadd.s32 %s50, 1
    %p54 = scmp.eq.s32.totalorder %s16, 1
    %p55 = scmp.ne.s32.totalorder %s50, %s52
    %p56 = scmp.eq.s32.totalorder %s16, 0
    %p57 = por %p55, %p56
    %p58 = scmp.ne.s32.totalorder %s50, %s52
    %p59 = scmp.eq.s32.totalorder %s21, 1
    %p60 = por %p58, %p59
    %p61 = scmp.ne.s32.totalorder %s52, %s53
    %p62 = scmp.eq.s32.totalorder %s21, 0
    %p63 = por %p61, %p62
    %p64 = scmp.ne.s32.totalorder %s52, %s53
    %p65 = scmp.eq.s32.totalorder %s22, 1
    %p66 = por %p64, %p65
    %p68 = scmp.ne.s32.totalorder %s53, %s67
    %p69 = scmp.eq.s32.totalorder %s22, 0
    %p70 = por %p68, %p69
    %s72 = sadd.s32 %s71, 1
    %p75 = scmp.eq.s32.totalorder %s16, 1
    %p76 = scmp.ne.s32.totalorder %s71, %s73
    %p77 = scmp.eq.s32.totalorder %s16, 0
    %p78 = por %p76, %p77
    %p79 = scmp.ne.s32.totalorder %s71, %s73
    %p80 = scmp.eq.s32.totalorder %s21, 1
    %p81 = por %p79, %p80
    %p82 = scmp.ne.s32.totalorder %s73, %s74
    %p83 = scmp.eq.s32.totalorder %s21, 0
    %p84 = por %p82, %p83
    %p85 = scmp.ne.s32.totalorder %s73, %s74
    %p86 = scmp.eq.s32.totalorder %s22, 1
    %p87 = por %p85, %p86
    %p89 = scmp.ne.s32.totalorder %s74, %s88
    %p90 = scmp.eq.s32.totalorder %s22, 0
    %p91 = por %p89, %p90
    %s93 = sadd.s32 %s92, 1
    %p96 = scmp.eq.s32.totalorder %s16, 1
    %p97 = scmp.ne.s32.totalorder %s92, %s94
    %p98 = scmp.eq.s32.totalorder %s16, 0
    %p99 = por %p97, %p98
    %p100 = scmp.ne.s32.totalorder %s92, %s94
    %p101 = scmp.eq.s32.totalorder %s21, 1
    %p102 = por %p100, %p101
    %p103 = scmp.ne.s32.totalorder %s94, %s95
    %p104 = scmp.eq.s32.totalorder %s21, 0
    %p105 = por %p103, %p104
    %p106 = scmp.ne.s32.totalorder %s94, %s95
    %p107 = scmp.eq.s32.totalorder %s22, 1
    %p108 = por %p106, %p107
    %p110 = scmp.ne.s32.totalorder %s95, %s109
    %p111 = scmp.eq.s32.totalorder %s22, 0
    %p112 = por %p110, %p111
    %s114 = sadd.s32 %s113, 1
    %p117 = scmp.eq.s32.totalorder %s16, 1
    %p118 = scmp.ne.s32.totalorder %s113, %s115
    %p119 = scmp.eq.s32.totalorder %s16, 0
    %p120 = por %p118, %p119
    %p121 = scmp.ne.s32.totalorder %s113, %s115
    %p122 = scmp.eq.s32.totalorder %s21, 1
    %p123 = por %p121, %p122
    %p124 = scmp.ne.s32.totalorder %s115, %s116
    %p125 = scmp.eq.s32.totalorder %s21, 0
    %p126 = por %p124, %p125
    %p127 = scmp.ne.s32.totalorder %s115, %s116
    %p128 = scmp.eq.s32.totalorder %s22, 1
    %p129 = por %p127, %p128
    %p131 = scmp.ne.s32.totalorder %s116, %s130
    %p132 = scmp.eq.s32.totalorder %s22, 0
    %p133 = por %p131, %p132
    %s135 = sadd.s32 %s134, 1
    %p138 = scmp.eq.s32.totalorder %s16, 1
    %p139 = scmp.ne.s32.totalorder %s134, %s136
    %p140 = scmp.eq.s32.totalorder %s16, 0
    %p141 = por %p139, %p140
    %p142 = scmp.ne.s32.totalorder %s134, %s136
    %p143 = scmp.eq.s32.totalorder %s21, 1
    %p144 = por %p142, %p143
    %p145 = scmp.ne.s32.totalorder %s136, %s137
    %p146 = scmp.eq.s32.totalorder %s21, 0
    %p147 = por %p145, %p146
    %p148 = scmp.ne.s32.totalorder %s136, %s137
    %p149 = scmp.eq.s32.totalorder %s22, 1
    %p150 = por %p148, %p149
    %p152 = scmp.ne.s32.totalorder %s137, %s151
    %p153 = scmp.eq.s32.totalorder %s22, 0
    %p154 = por %p152, %p153
    %s156 = sadd.s32 %s155, 1
    %p159 = scmp.eq.s32.totalorder %s16, 1
    %p160 = scmp.ne.s32.totalorder %s155, %s157
    %p161 = scmp.eq.s32.totalorder %s16, 0
    %p162 = por %p160, %p161
    %p163 = scmp.ne.s32.totalorder %s155, %s157
    %p164 = scmp.eq.s32.totalorder %s21, 1
    %p165 = por %p163, %p164
    %p166 = scmp.ne.s32.totalorder %s157, %s158
    %p167 = scmp.eq.s32.totalorder %s21, 0
    %p168 = por %p166, %p167
    %p169 = scmp.ne.s32.totalorder %s157, %s158
    %p170 = scmp.eq.s32.totalorder %s22, 1
    %p171 = por %p169, %p170
    %p173 = scmp.ne.s32.totalorder %s158, %s172
    %p174 = scmp.eq.s32.totalorder %s22, 0
    %p175 = por %p173, %p174
    %s176 = ssub.s32 %s16, %s23
    %p177 = scmp.eq.s32.totalorder %s176, 0
    %s179 = sadd.s32 %s178, 1
    %s180 = scalar_select %p177, %s178, %s179
    %p183 = pneg %p177
    %p184 = scmp.eq.s32.totalorder %s16, 1
    %p185 = por %p183, %p184
    %p186 = scmp.ne.s32.totalorder %s178, %s181
    %p187 = scmp.eq.s32.totalorder %s16, 0
    %p188 = por %p186, %p187
    %p189 = scmp.ne.s32.totalorder %s178, %s181
    %p190 = scmp.eq.s32.totalorder %s21, 1
    %p191 = por %p189, %p190
    %p192 = scmp.ne.s32.totalorder %s181, %s182
    %p193 = scmp.eq.s32.totalorder %s21, 0
    %p194 = por %p192, %p193
    %p195 = scmp.ne.s32.totalorder %s181, %s182
    %p196 = scmp.eq.s32.totalorder %s22, 1
    %p197 = por %p195, %p196
    %p199 = scmp.ne.s32.totalorder %s182, %s198
    %p200 = scmp.eq.s32.totalorder %s22, 0
    %p201 = por %p199, %p200
    %s203 = sadd.s32 %s202, 1
    %p206 = scmp.eq.s32.totalorder %s16, 1
    %p207 = scmp.ne.s32.totalorder %s202, %s204
    %p208 = scmp.eq.s32.totalorder %s16, 0
    %p209 = por %p207, %p208
    %p210 = scmp.ne.s32.totalorder %s202, %s204
    %p211 = scmp.eq.s32.totalorder %s21, 1
    %p212 = por %p210, %p211
    %p213 = scmp.ne.s32.totalorder %s204, %s205
    %p214 = scmp.eq.s32.totalorder %s21, 0
    %p215 = por %p213, %p214
    %p216 = scmp.ne.s32.totalorder %s204, %s205
    %p217 = scmp.eq.s32.totalorder %s22, 1
    %p218 = por %p216, %p217
    %p220 = scmp.ne.s32.totalorder %s205, %s219
    %p221 = scmp.eq.s32.totalorder %s22, 0
    %p222 = por %p220, %p221
    %s224 = sadd.s32 %s223, 1
    %p227 = scmp.eq.s32.totalorder %s16, 1
    %p228 = scmp.ne.s32.totalorder %s223, %s225
    %p229 = scmp.eq.s32.totalorder %s16, 0
    %p230 = por %p228, %p229
    %p231 = scmp.ne.s32.totalorder %s223, %s225
    %p232 = scmp.eq.s32.totalorder %s21, 1
    %p233 = por %p231, %p232
    %p234 = scmp.ne.s32.totalorder %s225, %s226
    %p235 = scmp.eq.s32.totalorder %s21, 0
    %p236 = por %p234, %p235
    %p237 = scmp.ne.s32.totalorder %s225, %s226
    %p238 = scmp.eq.s32.totalorder %s22, 1
    %p239 = por %p237, %p238
    %p241 = scmp.ne.s32.totalorder %s226, %s240
    %p242 = scmp.eq.s32.totalorder %s22, 0
    %p243 = por %p241, %p242
    %p244 = scmp.le.s32.totalorder 1, %s16
    %p245 = scmp.lt.s32.totalorder %s16, 3
    %p246 = pnand %p244, %p245
    %p247 = pneg %p246
    // Predicated region
    $region9: #{residual_forward.4} parent=5 // pred_check
      _
    $region10: #{residual_forward.4} parent=5 // pred_check_branch
      %249 = sbr.rel (%p246) target = $region12
    $region11: #{residual_forward.4} parent=5 // pred_region
      %s250 = ssub.s32 %s16, 1
      // Predicated region
      $region13: #{residual_forward.4} parent=11 // pred_check
        %p251 = pneg %p63
      $region14: #{residual_forward.4} parent=11 // pred_check_branch
        %253 = sbr.rel (%p251) target = $region16
      $region15: #{residual_forward.4} parent=11 // pred_region
        _
      $region16: #{residual_forward.4} parent=11 // pred_fallthru
        _
      // Predicated region
      $region17: #{residual_forward.4} parent=11 // pred_check
        %p254 = pneg %p84
      $region18: #{residual_forward.4} parent=11 // pred_check_branch
        %256 = sbr.rel (%p254) target = $region20
      $region19: #{residual_forward.4} parent=11 // pred_region
        _
      $region20: #{residual_forward.4} parent=11 // pred_fallthru
        _
      // Predicated region
      $region21: #{residual_forward.4} parent=11 // pred_check
        %p257 = pneg %p105
      $region22: #{residual_forward.4} parent=11 // pred_check_branch
        %259 = sbr.rel (%p257) target = $region24
      $region23: #{residual_forward.4} parent=11 // pred_region
        _
      $region24: #{residual_forward.4} parent=11 // pred_fallthru
        _
      // Predicated region
      $region25: #{residual_forward.4} parent=11 // pred_check
        %p260 = pneg %p126
      $region26: #{residual_forward.4} parent=11 // pred_check_branch
        %262 = sbr.rel (%p260) target = $region28
      $region27: #{residual_forward.4} parent=11 // pred_region
        _
      $region28: #{residual_forward.4} parent=11 // pred_fallthru
        _
      // Predicated region
      $region29: #{residual_forward.4} parent=11 // pred_check
        %p263 = pneg %p147
      $region30: #{residual_forward.4} parent=11 // pred_check_branch
        %265 = sbr.rel (%p263) target = $region32
      $region31: #{residual_forward.4} parent=11 // pred_region
        _
      $region32: #{residual_forward.4} parent=11 // pred_fallthru
        _
      // Predicated region
      $region33: #{residual_forward.4} parent=11 // pred_check
        %p266 = pneg %p168
      $region34: #{residual_forward.4} parent=11 // pred_check_branch
        %268 = sbr.rel (%p266) target = $region36
      $region35: #{residual_forward.4} parent=11 // pred_region
        _
      $region36: #{residual_forward.4} parent=11 // pred_fallthru
        _
    $region12: #{residual_forward.4} parent=5 // pred_fallthru
      _
    %p269 = scmp.lt.s32.totalorder %s16, 2
    // Predicated region
    $region37: #{residual_forward.4} parent=5 // pred_check
      %p270 = pneg %p269
    $region38: #{residual_forward.4} parent=5 // pred_check_branch
      %272 = sbr.rel (%p270) target = $region40
    $region39: #{residual_forward.4} parent=5 // pred_region
      // Predicated region
      $region41: #{residual_forward.4} parent=39 // pred_check
        %p273 = pneg %p36
      $region42: #{residual_forward.4} parent=39 // pred_check_branch
        %275 = sbr.rel (%p273) target = $region44
      $region43: #{residual_forward.4} parent=39 // pred_region
        %p276 = scmp.lt.s32.totalorder %s16, 1
        %s277 = scalar_select %p276, %s16, 1
        %s278 = smul.addr %s277, 2
        %s279 = smul.addr %s278, 4
        %s280 = scalar_lea.vmem %s0, %s279
      $region44: #{residual_forward.4} parent=39 // pred_fallthru
        _
    $region40: #{residual_forward.4} parent=5 // pred_fallthru
      _
    %p281 = scmp.le.s32.totalorder 1, %s16
    %p282 = scmp.lt.s32.totalorder %s16, 3
    %p283 = pnand %p281, %p282
    %p284 = pneg %p283
    // Predicated region
    $region45: #{residual_forward.4} parent=5 // pred_check
      _
    $region46: #{residual_forward.4} parent=5 // pred_check_branch
      %286 = sbr.rel (%p283) target = $region48
    $region47: #{residual_forward.4} parent=5 // pred_region
      %s287 = ssub.s32 %s16, 1
      %p288 = scmp.lt.s32.totalorder %s21, 1
      %s289 = scalar_select %p288, %s21, 1
      %s290 = smul.addr %s289, 2
      %s291 = smul.addr %s290, 4
      %s292 = scalar_lea.vmem %s0, %s291
      %p293 = pneg %p42
      %p294 = pneg %p39
      %p295 = pneg %p63
      %p296 = pneg %p60
      %p297 = pneg %p84
      %p298 = pneg %p81
      %p299 = pneg %p105
      %p300 = pneg %p102
      %p301 = pneg %p126
      %p302 = pneg %p123
      %p303 = pneg %p147
      %p304 = pneg %p144
      %p305 = pneg %p168
      %p306 = pneg %p165
      %p307 = pneg %p194
      %p308 = pneg %p191
      %p309 = scmp.lt.s32.totalorder %s21, 1
      %s310 = scalar_select %p309, %s21, 1
      %s311 = smul.addr %s310, 2
      %s312 = smul.addr %s311, 4
      %s313 = scalar_lea.vmem %s7, %s312
      %p314 = pneg %p215
      %p315 = pneg %p212
      %p316 = pneg %p236
      %p317 = pneg %p233
      %p318 = scmp.lt.s32.totalorder %s21, 1
      %s319 = scalar_select %p318, %s21, 1
      %s320 = smul.addr %s319, 2
      %s321 = smul.addr %s320, 4
      %s322 = scalar_lea.vmem %s0, %s321
      %p323 = scmp.lt.s32.totalorder %s21, 1
      %s324 = scalar_select %p323, %s21, 1
      %s325 = smul.addr %s324, 2
      %s326 = smul.addr %s325, 4
      %s327 = scalar_lea.vmem %s7, %s326
      %v329 = vld [vmem:[%s322] sm:$0xff]
      %v330 = vunpack.c.l.bf16 %v329
      %v331 = vunpack.c.h.bf16 %v329
      %v332 = vld [vmem:[%s1] sm:$0xff]
      %334 = vset.pattern.permute.xlu0 0
      %335 = vperm.xlu0 %334, %v332
      %v336 = vpop.permute.xlu0 %335
      %v338 = vmul.f32 %v330, %v336
      %v339 = vmul.f32 %v331, %v336
      %v340 = vld [vmem:[%s2] sm:$0xff]
      %342 = vset.pattern.permute.xlu0 0
      %343 = vperm.xlu0 %342, %v340
      %v344 = vpop.permute.xlu0 %343
      %v346 = vadd.f32 %v338, %v344
      %v347 = vadd.f32 %v339, %v344
      %v348 = vmax.f32 %v346, 0.0
      %v349 = vmax.f32 %v347, 0.0
      %v350 = vld [vmem:[%s3] sm:$0x3]
      %v351 = vld [vmem:[%s4] sm:$0x3]
      %352 = vrot.lane.b32.xlu0 %v348, 17
      %v353 = vpop.permute.xlu0 %352
      %354 = vrot.lane.b32.xlu0 %v349, 17
      %v355 = vpop.permute.xlu0 %354
      %v356 = vlaneseq
      %v357 = vand.u32 %v356, 127
      %vm358 = vcmp.lt.s32.totalorder %v357, 17
      %v359 = vsel %vm358, %v353, %v355
      %v360 = vsel %vm358, %v355, %v353
      %vm361 = vcmp.ge.s32.totalorder %v350, 1
      %vm362 = vcmp.lt.s32.totalorder %v350, 17
      %vm363 = vmand %vm361, %vm362
      %vm364 = vcmp.ge.s32.totalorder %v351, 1
      %vm365 = vmand %vm363, %vm364
      %vm366 = vcmp.lt.s32.totalorder %v351, 17
      %vm367 = vmand %vm365, %vm366
      %v368 = vsel %vm367, 1, 0
      %v369 = vperm.slane %v368, 0
      %v370 = vperm.slane %v368, 1
      %vm371 = vcmp.eq.s32.totalorder %v369, 1
      %vm372 = vcmp.eq.s32.totalorder %v370, 1
      %v373 = vsel %vm371, %v360, 0.0
      %v374 = vsel %vm372, %v359, 0.0
      %v375 = vpack.c.bf16 %v373, %v373
      %v376 = vpack.c.bf16 %v374, %v374
      %v377 = vld [vmem:[%s5] sm:$0xff]
      %v378 = vpack.c.bf16 %v377, %v377
      %379 = vrot.lane.b32.xlu0 %v348, 16
      %v380 = vpop.permute.xlu0 %379
      %381 = vrot.lane.b32.xlu0 %v349, 16
      %v382 = vpop.permute.xlu0 %381
      %vm383 = vcmp.lt.s32.totalorder %v357, 16
      %v384 = vsel %vm383, %v380, %v382
      %v385 = vsel %vm383, %v382, %v380
      %vm386 = vcmp.ge.s32.totalorder %v351, 0
      %vm387 = vmand %vm363, %vm386
      %vm388 = vcmp.lt.s32.totalorder %v351, 16
      %vm389 = vmand %vm387, %vm388
      %v390 = vsel %vm389, 1, 0
      %v391 = vperm.slane %v390, 0
      %v392 = vperm.slane %v390, 1
      %vm393 = vcmp.eq.s32.totalorder %v391, 1
      %vm394 = vcmp.eq.s32.totalorder %v392, 1
      %v395 = vsel %vm393, %v385, 0.0
      %v396 = vsel %vm394, %v384, 0.0
      %v397 = vpack.c.bf16 %v395, %v395
      %v398 = vpack.c.bf16 %v396, %v396
      %s399 = scalar_lea.vmem %s5, 8
      %v400 = vld [vmem:[%s399] sm:$0xff]
      %v401 = vpack.c.bf16 %v400, %v400
      %vm402 = vcmask 64512
      %v404 = vsel %vm402, %v401, 0
      %vm406 = vcmask 1043456
      %v408 = vsel %vm406, %v397, 0
      %v411 = vsel %vm406, %v398, 0
      %413 = vmatpush.bf16.msra.mxu0 0
      %414 = vmatpush.bf16.msra.mxu0 0
      %415 = vmatpush.bf16.msra.mxu0 0
      %416 = vmatpush.bf16.msra.mxu0 0
      %417 = vmatpush.bf16.msra.mxu0 0
      %418 = vmatpush.bf16.msra.mxu0 0
      %419 = vmatpush.bf16.msra.mxu0 0
      %420 = vmatpush.bf16.msra.mxu0 %v408
      %421 = vmatmul.bf16.gmra.mxu0 %v404
      %v422 = vpop.f32.mrf.mxu0
      %v423 = vadd.f32 0.0, %v422
      %v424 = vpop.f32.mrf.mxu0
      %425 = vdwg.mxu0
      %426 = vmatpush.bf16.msra.mxu0 0
      %427 = vmatpush.bf16.msra.mxu0 0
      %428 = vmatpush.bf16.msra.mxu0 0
      %429 = vmatpush.bf16.msra.mxu0 0
      %430 = vmatpush.bf16.msra.mxu0 0
      %431 = vmatpush.bf16.msra.mxu0 0
      %432 = vmatpush.bf16.msra.mxu0 0
      %433 = vmatpush.bf16.msra.mxu0 %v411
      %434 = vmatmul.bf16.gmra.mxu0 %v404
      %v435 = vpop.f32.mrf.mxu0
      %v436 = vadd.f32 0.0, %v435
      %v437 = vpop.f32.mrf.mxu0
      %438 = vdwg.mxu0
      %v440 = vsel %vm402, %v378, 0
      %v443 = vsel %vm406, %v375, 0
      %v446 = vsel %vm406, %v376, 0
      %448 = vmatpush.bf16.msra.mxu0 0
      %449 = vmatpush.bf16.msra.mxu0 0
      %450 = vmatpush.bf16.msra.mxu0 0
      %451 = vmatpush.bf16.msra.mxu0 0
      %452 = vmatpush.bf16.msra.mxu0 0
      %453 = vmatpush.bf16.msra.mxu0 0
      %454 = vmatpush.bf16.msra.mxu0 0
      %455 = vmatpush.bf16.msra.mxu0 %v443
      %456 = vmatmul.bf16.gmra.mxu0 %v440
      %v457 = vpop.f32.mrf.mxu0
      %v458 = vadd.f32 %v423, %v457
      %v459 = vpop.f32.mrf.mxu0
      %460 = vdwg.mxu0
      %461 = vmatpush.bf16.msra.mxu0 0
      %462 = vmatpush.bf16.msra.mxu0 0
      %463 = vmatpush.bf16.msra.mxu0 0
      %464 = vmatpush.bf16.msra.mxu0 0
      %465 = vmatpush.bf16.msra.mxu0 0
      %466 = vmatpush.bf16.msra.mxu0 0
      %467 = vmatpush.bf16.msra.mxu0 0
      %468 = vmatpush.bf16.msra.mxu0 %v446
      %469 = vmatmul.bf16.gmra.mxu0 %v440
      %v470 = vpop.f32.mrf.mxu0
      %v471 = vadd.f32 %v436, %v470
      %v472 = vpop.f32.mrf.mxu0
      %473 = vdwg.mxu0
      %474 = vrot.lane.b32.xlu0 %v348, 15
      %v475 = vpop.permute.xlu0 %474
      %476 = vrot.lane.b32.xlu0 %v349, 15
      %v477 = vpop.permute.xlu0 %476
      %vm478 = vcmp.lt.s32.totalorder %v357, 15
      %v479 = vsel %vm478, %v475, %v477
      %v480 = vsel %vm478, %v477, %v475
      %vm481 = vcmp.ge.s32.totalorder %v351, 4294967295
      %vm482 = vmand %vm363, %vm481
      %vm483 = vcmp.lt.s32.totalorder %v351, 15
      %vm484 = vmand %vm482, %vm483
      %v485 = vsel %vm484, 1, 0
      %v486 = vperm.slane %v485, 0
      %v487 = vperm.slane %v485, 1
      %vm488 = vcmp.eq.s32.totalorder %v486, 1
      %vm489 = vcmp.eq.s32.totalorder %v487, 1
      %v490 = vsel %vm488, %v480, 0.0
      %v491 = vsel %vm489, %v479, 0.0
      %v492 = vpack.c.bf16 %v490, %v490
      %v493 = vpack.c.bf16 %v491, %v491
      %s494 = scalar_lea.vmem %s5, 16
      %v495 = vld [vmem:[%s494] sm:$0xff]
      %v496 = vpack.c.bf16 %v495, %v495
      %v498 = vsel %vm402, %v496, 0
      %v501 = vsel %vm406, %v492, 0
      %v504 = vsel %vm406, %v493, 0
      %506 = vmatpush.bf16.msra.mxu0 0
      %507 = vmatpush.bf16.msra.mxu0 0
      %508 = vmatpush.bf16.msra.mxu0 0
      %509 = vmatpush.bf16.msra.mxu0 0
      %510 = vmatpush.bf16.msra.mxu0 0
      %511 = vmatpush.bf16.msra.mxu0 0
      %512 = vmatpush.bf16.msra.mxu0 0
      %513 = vmatpush.bf16.msra.mxu0 %v501
      %514 = vmatmul.bf16.gmra.mxu0 %v498
      %v515 = vpop.f32.mrf.mxu0
      %v516 = vadd.f32 0.0, %v515
      %v517 = vpop.f32.mrf.mxu0
      %518 = vdwg.mxu0
      %519 = vmatpush.bf16.msra.mxu0 0
      %520 = vmatpush.bf16.msra.mxu0 0
      %521 = vmatpush.bf16.msra.mxu0 0
      %522 = vmatpush.bf16.msra.mxu0 0
      %523 = vmatpush.bf16.msra.mxu0 0
      %524 = vmatpush.bf16.msra.mxu0 0
      %525 = vmatpush.bf16.msra.mxu0 0
      %526 = vmatpush.bf16.msra.mxu0 %v504
      %527 = vmatmul.bf16.gmra.mxu0 %v498
      %v528 = vpop.f32.mrf.mxu0
      %v529 = vadd.f32 0.0, %v528
      %v530 = vpop.f32.mrf.mxu0
      %531 = vdwg.mxu0
      %v532 = vadd.f32 %v458, %v516
      %v533 = vadd.f32 %v471, %v529
      %534 = vrot.lane.b32.xlu0 %v348, 1
      %v535 = vpop.permute.xlu0 %534
      %536 = vrot.lane.b32.xlu0 %v349, 1
      %v537 = vpop.permute.xlu0 %536
      %vm538 = vcmp.lt.s32.totalorder %v357, 1
      %v539 = vsel %vm538, %v535, %v537
      %v540 = vsel %vm538, %v537, %v535
      %vm541 = vcmp.ge.s32.totalorder %v350, 0
      %vm542 = vcmp.lt.s32.totalorder %v350, 16
      %vm543 = vmand %vm541, %vm542
      %vm544 = vmand %vm543, %vm364
      %vm545 = vmand %vm544, %vm366
      %v546 = vsel %vm545, 1, 0
      %v547 = vperm.slane %v546, 0
      %v548 = vperm.slane %v546, 1
      %vm549 = vcmp.eq.s32.totalorder %v547, 1
      %vm550 = vcmp.eq.s32.totalorder %v548, 1
      %v551 = vsel %vm549, %v540, 0.0
      %v552 = vsel %vm550, %v539, 0.0
      %v553 = vpack.c.bf16 %v551, %v551
      %v554 = vpack.c.bf16 %v552, %v552
      %s555 = scalar_lea.vmem %s5, 24
      %v556 = vld [vmem:[%s555] sm:$0xff]
      %v557 = vpack.c.bf16 %v556, %v556
      %v559 = vsel %vm402, %v557, 0
      %v562 = vsel %vm406, %v553, 0
      %v565 = vsel %vm406, %v554, 0
      %567 = vmatpush.bf16.msra.mxu0 0
      %568 = vmatpush.bf16.msra.mxu0 0
      %569 = vmatpush.bf16.msra.mxu0 0
      %570 = vmatpush.bf16.msra.mxu0 0
      %571 = vmatpush.bf16.msra.mxu0 0
      %572 = vmatpush.bf16.msra.mxu0 0
      %573 = vmatpush.bf16.msra.mxu0 0
      %574 = vmatpush.bf16.msra.mxu0 %v562
      %575 = vmatmul.bf16.gmra.mxu0 %v559
      %v576 = vpop.f32.mrf.mxu0
      %v577 = vadd.f32 0.0, %v576
      %v578 = vpop.f32.mrf.mxu0
      %579 = vdwg.mxu0
      %580 = vmatpush.bf16.msra.mxu0 0
      %581 = vmatpush.bf16.msra.mxu0 0
      %582 = vmatpush.bf16.msra.mxu0 0
      %583 = vmatpush.bf16.msra.mxu0 0
      %584 = vmatpush.bf16.msra.mxu0 0
      %585 = vmatpush.bf16.msra.mxu0 0
      %586 = vmatpush.bf16.msra.mxu0 0
      %587 = vmatpush.bf16.msra.mxu0 %v565
      %588 = vmatmul.bf16.gmra.mxu0 %v559
      %v589 = vpop.f32.mrf.mxu0
      %v590 = vadd.f32 0.0, %v589
      %v591 = vpop.f32.mrf.mxu0
      %592 = vdwg.mxu0
      %v593 = vadd.f32 %v532, %v577
      %v594 = vadd.f32 %v533, %v590
      %vm595 = vmand %vm543, %vm386
      %vm596 = vmand %vm595, %vm388
      %v597 = vsel %vm596, 1, 0
      %v598 = vperm.slane %v597, 0
      %v599 = vperm.slane %v597, 1
      %vm600 = vcmp.eq.s32.totalorder %v598, 1
      %vm601 = vcmp.eq.s32.totalorder %v599, 1
      %v602 = vsel %vm600, %v348, 0.0
      %v603 = vsel %vm601, %v349, 0.0
      %v604 = vpack.c.bf16 %v602, %v602
      %v605 = vpack.c.bf16 %v603, %v603
      %s606 = scalar_lea.vmem %s5, 32
      %v607 = vld [vmem:[%s606] sm:$0xff]
      %v608 = vpack.c.bf16 %v607, %v607
      %v610 = vsel %vm402, %v608, 0
      %v613 = vsel %vm406, %v604, 0
      %v616 = vsel %vm406, %v605, 0
      %618 = vmatpush.bf16.msra.mxu0 0
      %619 = vmatpush.bf16.msra.mxu0 0
      %620 = vmatpush.bf16.msra.mxu0 0
      %621 = vmatpush.bf16.msra.mxu0 0
      %622 = vmatpush.bf16.msra.mxu0 0
      %623 = vmatpush.bf16.msra.mxu0 0
      %624 = vmatpush.bf16.msra.mxu0 0
      %625 = vmatpush.bf16.msra.mxu0 %v613
      %626 = vmatmul.bf16.gmra.mxu0 %v610
      %v627 = vpop.f32.mrf.mxu0
      %v628 = vadd.f32 0.0, %v627
      %v629 = vpop.f32.mrf.mxu0
      %630 = vdwg.mxu0
      %631 = vmatpush.bf16.msra.mxu0 0
      %632 = vmatpush.bf16.msra.mxu0 0
      %633 = vmatpush.bf16.msra.mxu0 0
      %634 = vmatpush.bf16.msra.mxu0 0
      %635 = vmatpush.bf16.msra.mxu0 0
      %636 = vmatpush.bf16.msra.mxu0 0
      %637 = vmatpush.bf16.msra.mxu0 0
      %638 = vmatpush.bf16.msra.mxu0 %v616
      %639 = vmatmul.bf16.gmra.mxu0 %v610
      %v640 = vpop.f32.mrf.mxu0
      %v641 = vadd.f32 0.0, %v640
      %v642 = vpop.f32.mrf.mxu0
      %643 = vdwg.mxu0
      %v644 = vadd.f32 %v593, %v628
      %v645 = vadd.f32 %v594, %v641
      %646 = vrot.lane.b32.xlu0 %v348, 127
      %v647 = vpop.permute.xlu0 %646
      %648 = vrot.lane.b32.xlu0 %v349, 127
      %v649 = vpop.permute.xlu0 %648
      %vm650 = vcmp.lt.s32.totalorder %v357, 127
      %v651 = vsel %vm650, %v647, %v649
      %v652 = vsel %vm650, %v649, %v647
      %vm653 = vmand %vm543, %vm481
      %vm654 = vmand %vm653, %vm483
      %v655 = vsel %vm654, 1, 0
      %v656 = vperm.slane %v655, 0
      %v657 = vperm.slane %v655, 1
      %vm658 = vcmp.eq.s32.totalorder %v656, 1
      %vm659 = vcmp.eq.s32.totalorder %v657, 1
      %v660 = vsel %vm658, %v651, 0.0
      %v661 = vsel %vm659, %v652, 0.0
      %v662 = vpack.c.bf16 %v660, %v660
      %v663 = vpack.c.bf16 %v661, %v661
      %s664 = scalar_lea.vmem %s5, 40
      %v665 = vld [vmem:[%s664] sm:$0xff]
      %v666 = vpack.c.bf16 %v665, %v665
      %v668 = vsel %vm402, %v666, 0
      %v671 = vsel %vm406, %v662, 0
      %v674 = vsel %vm406, %v663, 0
      %676 = vmatpush.bf16.msra.mxu0 0
      %677 = vmatpush.bf16.msra.mxu0 0
      %678 = vmatpush.bf16.msra.mxu0 0
      %679 = vmatpush.bf16.msra.mxu0 0
      %680 = vmatpush.bf16.msra.mxu0 0
      %681 = vmatpush.bf16.msra.mxu0 0
      %682 = vmatpush.bf16.msra.mxu0 0
      %683 = vmatpush.bf16.msra.mxu0 %v671
      %684 = vmatmul.bf16.gmra.mxu0 %v668
      %v685 = vpop.f32.mrf.mxu0
      %v686 = vadd.f32 0.0, %v685
      %v687 = vpop.f32.mrf.mxu0
      %688 = vdwg.mxu0
      %689 = vmatpush.bf16.msra.mxu0 0
      %690 = vmatpush.bf16.msra.mxu0 0
      %691 = vmatpush.bf16.msra.mxu0 0
      %692 = vmatpush.bf16.msra.mxu0 0
      %693 = vmatpush.bf16.msra.mxu0 0
      %694 = vmatpush.bf16.msra.mxu0 0
      %695 = vmatpush.bf16.msra.mxu0 0
      %696 = vmatpush.bf16.msra.mxu0 %v674
      %697 = vmatmul.bf16.gmra.mxu0 %v668
      %v698 = vpop.f32.mrf.mxu0
      %v699 = vadd.f32 0.0, %v698
      %v700 = vpop.f32.mrf.mxu0
      %701 = vdwg.mxu0
      %v702 = vadd.f32 %v644, %v686
      %v703 = vadd.f32 %v645, %v699
      %704 = vrot.lane.b32.xlu0 %v348, 113
      %v705 = vpop.permute.xlu0 %704
      %706 = vrot.lane.b32.xlu0 %v349, 113
      %v707 = vpop.permute.xlu0 %706
      %vm708 = vcmp.lt.s32.totalorder %v357, 113
      %v709 = vsel %vm708, %v705, %v707
      %v710 = vsel %vm708, %v707, %v705
      %vm711 = vcmp.ge.s32.totalorder %v350, 4294967295
      %vm712 = vcmp.lt.s32.totalorder %v350, 15
      %vm713 = vmand %vm711, %vm712
      %vm714 = vmand %vm713, %vm364
      %vm715 = vmand %vm714, %vm366
      %v716 = vsel %vm715, 1, 0
      %v717 = vperm.slane %v716, 0
      %v718 = vperm.slane %v716, 1
      %vm719 = vcmp.eq.s32.totalorder %v717, 1
      %vm720 = vcmp.eq.s32.totalorder %v718, 1
      %v721 = vsel %vm719, %v709, 0.0
      %v722 = vsel %vm720, %v710, 0.0
      %v723 = vpack.c.bf16 %v721, %v721
      %v724 = vpack.c.bf16 %v722, %v722
      %s725 = scalar_lea.vmem %s5, 48
      %v726 = vld [vmem:[%s725] sm:$0xff]
      %v727 = vpack.c.bf16 %v726, %v726
      %v729 = vsel %vm402, %v727, 0
      %v732 = vsel %vm406, %v723, 0
      %v735 = vsel %vm406, %v724, 0
      %737 = vmatpush.bf16.msra.mxu0 0
      %738 = vmatpush.bf16.msra.mxu0 0
      %739 = vmatpush.bf16.msra.mxu0 0
      %740 = vmatpush.bf16.msra.mxu0 0
      %741 = vmatpush.bf16.msra.mxu0 0
      %742 = vmatpush.bf16.msra.mxu0 0
      %743 = vmatpush.bf16.msra.mxu0 0
      %744 = vmatpush.bf16.msra.mxu0 %v732
      %745 = vmatmul.bf16.gmra.mxu0 %v729
      %v746 = vpop.f32.mrf.mxu0
      %v747 = vadd.f32 0.0, %v746
      %v748 = vpop.f32.mrf.mxu0
      %749 = vdwg.mxu0
      %750 = vmatpush.bf16.msra.mxu0 0
      %751 = vmatpush.bf16.msra.mxu0 0
      %752 = vmatpush.bf16.msra.mxu0 0
      %753 = vmatpush.bf16.msra.mxu0 0
      %754 = vmatpush.bf16.msra.mxu0 0
      %755 = vmatpush.bf16.msra.mxu0 0
      %756 = vmatpush.bf16.msra.mxu0 0
      %757 = vmatpush.bf16.msra.mxu0 %v735
      %758 = vmatmul.bf16.gmra.mxu0 %v729
      %v759 = vpop.f32.mrf.mxu0
      %v760 = vadd.f32 0.0, %v759
      %v761 = vpop.f32.mrf.mxu0
      %762 = vdwg.mxu0
      %v763 = vadd.f32 %v702, %v747
      %v764 = vadd.f32 %v703, %v760
      %765 = vrot.lane.b32.xlu0 %v348, 112
      %v766 = vpop.permute.xlu0 %765
      %767 = vrot.lane.b32.xlu0 %v349, 112
      %v768 = vpop.permute.xlu0 %767
      %vm769 = vcmp.lt.s32.totalorder %v357, 112
      %v770 = vsel %vm769, %v766, %v768
      %v771 = vsel %vm769, %v768, %v766
      %vm772 = vmand %vm713, %vm386
      %vm773 = vmand %vm772, %vm388
      %v774 = vsel %vm773, 1, 0
      %v775 = vperm.slane %v774, 0
      %v776 = vperm.slane %v774, 1
      %vm777 = vcmp.eq.s32.totalorder %v775, 1
      %vm778 = vcmp.eq.s32.totalorder %v776, 1
      %v779 = vsel %vm777, %v770, 0.0
      %v780 = vsel %vm778, %v771, 0.0
      %v781 = vpack.c.bf16 %v779, %v779
      %v782 = vpack.c.bf16 %v780, %v780
      %s783 = scalar_lea.vmem %s5, 56
      %v784 = vld [vmem:[%s783] sm:$0xff]
      %v785 = vpack.c.bf16 %v784, %v784
      %v787 = vsel %vm402, %v785, 0
      %v790 = vsel %vm406, %v781, 0
      %v793 = vsel %vm406, %v782, 0
      %795 = vmatpush.bf16.msra.mxu0 0
      %796 = vmatpush.bf16.msra.mxu0 0
      %797 = vmatpush.bf16.msra.mxu0 0
      %798 = vmatpush.bf16.msra.mxu0 0
      %799 = vmatpush.bf16.msra.mxu0 0
      %800 = vmatpush.bf16.msra.mxu0 0
      %801 = vmatpush.bf16.msra.mxu0 0
      %802 = vmatpush.bf16.msra.mxu0 %v790
      %803 = vmatmul.bf16.gmra.mxu0 %v787
      %v804 = vpop.f32.mrf.mxu0
      %v805 = vadd.f32 0.0, %v804
      %v806 = vpop.f32.mrf.mxu0
      %807 = vdwg.mxu0
      %808 = vmatpush.bf16.msra.mxu0 0
      %809 = vmatpush.bf16.msra.mxu0 0
      %810 = vmatpush.bf16.msra.mxu0 0
      %811 = vmatpush.bf16.msra.mxu0 0
      %812 = vmatpush.bf16.msra.mxu0 0
      %813 = vmatpush.bf16.msra.mxu0 0
      %814 = vmatpush.bf16.msra.mxu0 0
      %815 = vmatpush.bf16.msra.mxu0 %v793
      %816 = vmatmul.bf16.gmra.mxu0 %v787
      %v817 = vpop.f32.mrf.mxu0
      %v818 = vadd.f32 0.0, %v817
      %v819 = vpop.f32.mrf.mxu0
      %820 = vdwg.mxu0
      %v821 = vadd.f32 %v763, %v805
      %v822 = vadd.f32 %v764, %v818
      %823 = vrot.lane.b32.xlu0 %v348, 111
      %v824 = vpop.permute.xlu0 %823
      %825 = vrot.lane.b32.xlu0 %v349, 111
      %v826 = vpop.permute.xlu0 %825
      %vm827 = vcmp.lt.s32.totalorder %v357, 111
      %v828 = vsel %vm827, %v824, %v826
      %v829 = vsel %vm827, %v826, %v824
      %vm830 = vmand %vm713, %vm481
      %vm831 = vmand %vm830, %vm483
      %v832 = vsel %vm831, 1, 0
      %v833 = vperm.slane %v832, 0
      %v834 = vperm.slane %v832, 1
      %vm835 = vcmp.eq.s32.totalorder %v833, 1
      %vm836 = vcmp.eq.s32.totalorder %v834, 1
      %v837 = vsel %vm835, %v828, 0.0
      %v838 = vsel %vm836, %v829, 0.0
      %v839 = vpack.c.bf16 %v837, %v837
      %v840 = vpack.c.bf16 %v838, %v838
      %s841 = scalar_lea.vmem %s5, 64
      %v842 = vld [vmem:[%s841] sm:$0xff]
      %v843 = vpack.c.bf16 %v842, %v842
      %v845 = vsel %vm402, %v843, 0
      %v848 = vsel %vm406, %v839, 0
      %v851 = vsel %vm406, %v840, 0
      %853 = vmatpush.bf16.msra.mxu0 0
      %854 = vmatpush.bf16.msra.mxu0 0
      %855 = vmatpush.bf16.msra.mxu0 0
      %856 = vmatpush.bf16.msra.mxu0 0
      %857 = vmatpush.bf16.msra.mxu0 0
      %858 = vmatpush.bf16.msra.mxu0 0
      %859 = vmatpush.bf16.msra.mxu0 0
      %860 = vmatpush.bf16.msra.mxu0 %v848
      %861 = vmatmul.bf16.gmra.mxu0 %v845
      %v862 = vpop.f32.mrf.mxu0
      %v863 = vadd.f32 0.0, %v862
      %v864 = vpop.f32.mrf.mxu0
      %865 = vdwg.mxu0
      %866 = vmatpush.bf16.msra.mxu0 0
      %867 = vmatpush.bf16.msra.mxu0 0
      %868 = vmatpush.bf16.msra.mxu0 0
      %869 = vmatpush.bf16.msra.mxu0 0
      %870 = vmatpush.bf16.msra.mxu0 0
      %871 = vmatpush.bf16.msra.mxu0 0
      %872 = vmatpush.bf16.msra.mxu0 0
      %873 = vmatpush.bf16.msra.mxu0 %v851
      %874 = vmatmul.bf16.gmra.mxu0 %v845
      %v875 = vpop.f32.mrf.mxu0
      %v876 = vadd.f32 0.0, %v875
      %v877 = vpop.f32.mrf.mxu0
      %878 = vdwg.mxu0
      %v879 = vadd.f32 %v821, %v863
      %v880 = vadd.f32 %v822, %v876
      %v881 = vld [vmem:[%s6] sm:$0xff]
      %883 = vset.pattern.permute.xlu0 0
      %884 = vperm.xlu0 %883, %v881
      %v885 = vpop.permute.xlu0 %884
      %v887 = vadd.f32 %v879, %v885
      %v888 = vadd.f32 %v880, %v885
      %v889 = vpack.c.bf16 %v888, %v887
      %890 = vst [vmem:[%s327] sm:$0xff] %v889
      %p891 = scmp.eq.s32.totalorder %s21, 0
      // Predicated region
      $region49: #{residual_forward.4} parent=47 // pred_check
        %p892 = pneg %p891
      $region50: #{residual_forward.4} parent=47 // pred_check_branch
        %894 = sbr.rel (%p892) target = $region52
      $region51: #{residual_forward.4} parent=47 // pred_region
        %vm895 = vcmask 7168
        %896 = vst.msk [vmem:[#allocation2] sm:$0xff] %vm895, 0.0
        %897 = vst.msk [vmem:[#allocation3] sm:$0xff] %vm895, 0.0
      $region52: #{residual_forward.4} parent=47 // pred_fallthru
        _
      %v898 = vld [vmem:[#allocation2] sm:$0xff]
      %v899 = vadd.f32 %v887, %v888
      %900 = vadd.xlane.f32.xlu0 %v899
      %v901 = vpop.xlane.xlu0 %900
      %v902 = vadd.f32 %v898, %v901
      %vm903 = vcmask 7168
      %904 = vst.msk [vmem:[#allocation2] sm:$0xff] %vm903, %v902
      %v905 = vld [vmem:[#allocation3] sm:$0xff]
      %v906 = vmul.f32 %v887, %v887
      %v907 = vmul.f32 %v888, %v888
      %v908 = vadd.f32 %v906, %v907
      %909 = vadd.xlane.f32.xlu0 %v908
      %v910 = vpop.xlane.xlu0 %909
      %v911 = vadd.f32 %v905, %v910
      %912 = vst.msk [vmem:[#allocation3] sm:$0xff] %vm903, %v911
      %p913 = scmp.eq.s32.totalorder %s21, 1
      // Predicated region
      $region53: #{residual_forward.4} parent=47 // pred_check
        %p914 = pneg %p913
      $region54: #{residual_forward.4} parent=47 // pred_check_branch
        %916 = sbr.rel (%p914) target = $region56
      $region55: #{residual_forward.4} parent=47 // pred_region
        %v917 = vld [vmem:[#allocation2] sm:$0xff]
        %918 = vst.msk [vmem:[%s8] sm:$0xff] %vm903, %v917
        %v919 = vld [vmem:[#allocation3] sm:$0xff]
        %920 = vst.msk [vmem:[%s9] sm:$0xff] %vm903, %v919
      $region56: #{residual_forward.4} parent=47 // pred_fallthru
        _
      %p921 = scmp.lt.s32.totalorder %s21, 1
      %s922 = scalar_select %p921, %s21, 1
      %s923 = smul.addr %s922, 2
      %s924 = smul.addr %s923, 4
      %s925 = scalar_lea.vmem %s7, %s924
      // Predicated region
      $region57: #{residual_forward.4} parent=47 // pred_check
        %p926 = pneg %p191
      $region58: #{residual_forward.4} parent=47 // pred_check_branch
        %928 = sbr.rel (%p926) target = $region60
      $region59: #{residual_forward.4} parent=47 // pred_region
        _
      $region60: #{residual_forward.4} parent=47 // pred_fallthru
        _
      // Predicated region
      $region61: #{residual_forward.4} parent=47 // pred_check
        %p929 = pneg %p212
      $region62: #{residual_forward.4} parent=47 // pred_check_branch
        %931 = sbr.rel (%p929) target = $region64
      $region63: #{residual_forward.4} parent=47 // pred_region
        _
      $region64: #{residual_forward.4} parent=47 // pred_fallthru
        _
      // Predicated region
      $region65: #{residual_forward.4} parent=47 // pred_check
        %p932 = pneg %p233
      $region66: #{residual_forward.4} parent=47 // pred_check_branch
        %934 = sbr.rel (%p932) target = $region68
      $region67: #{residual_forward.4} parent=47 // pred_region
        _
      $region68: #{residual_forward.4} parent=47 // pred_fallthru
        _
      // Predicated region
      $region69: #{residual_forward.4} parent=47 // pred_check
        %p935 = pneg %p212
      $region70: #{residual_forward.4} parent=47 // pred_check_branch
        %937 = sbr.rel (%p935) target = $region72
      $region71: #{residual_forward.4} parent=47 // pred_region
        _
      $region72: #{residual_forward.4} parent=47 // pred_fallthru
        _
      // Predicated region
      $region73: #{residual_forward.4} parent=47 // pred_check
        %p938 = pneg %p233
      $region74: #{residual_forward.4} parent=47 // pred_check_branch
        %940 = sbr.rel (%p938) target = $region76
      $region75: #{residual_forward.4} parent=47 // pred_region
        _
      $region76: #{residual_forward.4} parent=47 // pred_fallthru
        _
    $region48: #{residual_forward.4} parent=5 // pred_fallthru
      _
    %p941 = scmp.le.s32.totalorder 2, %s16
    // Predicated region
    $region77: #{residual_forward.4} parent=5 // pred_check
      %p942 = pneg %p941
    $region78: #{residual_forward.4} parent=5 // pred_check_branch
      %944 = sbr.rel (%p942) target = $region80
    $region79: #{residual_forward.4} parent=5 // pred_region
      %s945 = ssub.s32 %s16, 2
      // Predicated region
      $region81: #{residual_forward.4} parent=79 // pred_check
        %p946 = pneg %p197
      $region82: #{residual_forward.4} parent=79 // pred_check_branch
        %948 = sbr.rel (%p946) target = $region84
      $region83: #{residual_forward.4} parent=79 // pred_region
        %p949 = scmp.lt.s32.totalorder %s22, 1
        %s950 = scalar_select %p949, %s22, 1
        %s951 = smul.addr %s950, 2
        %s952 = smul.addr %s951, 4
        %s953 = scalar_lea.vmem %s7, %s952
      $region84: #{residual_forward.4} parent=79 // pred_fallthru
        _
    $region80: #{residual_forward.4} parent=5 // pred_fallthru
      _
  $region6: #{residual_forward.4} parent=0 // loop_footer
    %s20 = sadd.s32 1, %s16
  $region7: #{residual_forward.4} parent=0 // loop_footer_branch
    %15 = sbr.rel target = $region3
  $region8: #{residual_forward.4} parent=0 // loop_exit
    _

</llo_original>
